<compile_context>
chip_gen: v6e
topology: v6e:2x2x1
jax: 0.10.0
libtpu: 0.0.40
codegen_flags: <defaults>
</compile_context>

<pallas_src>
import jax
import jax.numpy as jnp
from jax.experimental import pallas as pl
from jax.experimental.pallas import tpu as pltpu


# --------------------------------------------------------------------------------------
# Kernel 1: the recurrent decoder step.  grid=(T,), state carried in VMEM scratch.
# --------------------------------------------------------------------------------------
def decoder_step_kernel(emb_ref, mask_ref, hc0_ref, pk_txt_ref, pk_vis_ref,
                        w_q_ref, w_e_ref, w_lstm_ref, b_lstm_ref, w_out_ref,
                        pre_ref, attn_ref,
                        h_sc, c_sc):
    f32 = jnp.float32
    H = h_sc.shape[1]
    t = pl.program_id(0)

    @pl.when(t == 0)
    def _init():
        h_sc[...] = hc0_ref[0]
        c_sc[...] = hc0_ref[1]
        attn_ref[...] = jnp.zeros_like(attn_ref)

    h = h_sc[...]                                   # [B, H] f32
    c = c_sc[...]                                   # [B, H] f32
    emb = emb_ref[0]                                # [B, H] f32 (gathered in wrapper)
    pk_txt = pk_txt_ref[...].astype(f32)            # [B, Mc, H]
    pk_vis = pk_vis_ref[...].astype(f32)            # [B, Ms, H]

    # --- fused query projection (textual | visual stacked along lanes) ---
    w_q = w_q_ref[...]                              # [H, 2H]
    q = jnp.dot(h.astype(w_q.dtype), w_q, preferred_element_type=f32)   # [B, 2H]
    q_t = q[:, :H]
    q_v = q[:, H:]

    w_te = w_e_ref[0][None, None, :].astype(f32)    # [1, 1, H]
    w_ve = w_e_ref[1][None, None, :].astype(f32)

    # --- textual attention (commands-length mask applied as additive 0 / -1e30 bias) ---
    s_t = jnp.sum(jnp.tanh(q_t[:, None, :] + pk_txt) * w_te, axis=-1) + mask_ref[...]
    s_t = s_t - jnp.max(s_t, axis=-1, keepdims=True)
    p_t = jnp.exp(s_t)
    d_t = jnp.sum(p_t, axis=-1, keepdims=True)                 # [B, 1]
    inv_t = pl.reciprocal(d_t, approx=True)                    # EUP slot
    inv_t = inv_t * (2.0 - d_t * inv_t)                        # 1 NR step on [B,1] -> f32 accuracy
    a_t = p_t * inv_t                                          # [B, Mc]
    ctx_cmd = jnp.sum(a_t[:, :, None] * pk_txt, axis=1)        # [B, H]

    # --- visual attention (all Ms positions valid) ---
    s_v = jnp.sum(jnp.tanh(q_v[:, None, :] + pk_vis) * w_ve, axis=-1)
    s_v = s_v - jnp.max(s_v, axis=-1, keepdims=True)
    p_v = jnp.exp(s_v)
    d_v = jnp.sum(p_v, axis=-1, keepdims=True)
    inv_v = pl.reciprocal(d_v, approx=True)
    inv_v = inv_v * (2.0 - d_v * inv_v)
    a_v = p_v * inv_v                                          # [B, Ms]
    ctx_sit = jnp.sum(a_v[:, :, None] * pk_vis, axis=1)        # [B, H]

    # --- LSTM cell, single fused gate matmul (PyTorch gate order i, f, g, o) ---
    w_lstm = w_lstm_ref[...]                                   # [4H, 4H] = [w_ih.T ; w_hh.T]
    x = jnp.concatenate([emb, ctx_cmd, ctx_sit, h], axis=-1)   # [B, 4H]
    gates = jnp.dot(x.astype(w_lstm.dtype), w_lstm,
                    preferred_element_type=f32) + b_lstm_ref[...]
    i_g = jax.nn.sigmoid(gates[:, 0 * H:1 * H])
    f_g = jax.nn.sigmoid(gates[:, 1 * H:2 * H])
    g_g = jnp.tanh(gates[:, 2 * H:3 * H])
    o_g = jax.nn.sigmoid(gates[:, 3 * H:4 * H])
    c_new = f_g * c + i_g * g_g
    h_new = o_g * jnp.tanh(c_new)
    h_sc[...] = h_new
    c_sc[...] = c_new

    # --- pre-output projection (single fused dot); vocab projection happens elsewhere ---
    w_out = w_out_ref[...]                                     # [4H, H] = w_o2h.T
    pre = jnp.concatenate([emb, h_new, ctx_cmd, ctx_sit], axis=-1)   # [B, 4H]
    pre_ref[0] = jnp.dot(pre.astype(w_out.dtype), w_out, preferred_element_type=f32)

    attn_ref[...] += a_v


# --------------------------------------------------------------------------------------
# Kernel 2: vocab projection pre_h [T,B,H] @ w_h2o [H,V] -> [T,B,V], tiled over (T, V).
# --------------------------------------------------------------------------------------
def vocab_proj_kernel(pre_ref, w_ref, out_ref):
    w = w_ref[...]
    out_ref[0] = jnp.dot(pre_ref[0].astype(w.dtype), w,
                         preferred_element_type=jnp.float32).astype(out_ref.dtype)


# --------------------------------------------------------------------------------------
# Wrapper
# --------------------------------------------------------------------------------------
def attention_decoder_forward(params, input_tokens, input_lengths, init_hidden,
                              encoded_commands, commands_lengths, encoded_situations,
                              mxu_dtype=jnp.float32):
    f32 = jnp.float32
    B, T = input_tokens.shape
    Mc = encoded_commands.shape[0]
    Ms = encoded_situations.shape[1]
    V, H = params["embedding"].shape

    # a row with zero valid command positions would give a uniform (not masked) softmax
    assert all(int(l) >= 1 for l in commands_lengths), "commands_lengths must be >= 1"

    # --- hoisted, time-invariant prep (plain XLA) ---
    tok_tb = jnp.transpose(input_tokens.astype(jnp.int32), (1, 0))             # [T, B]
    emb_seq = jnp.take(params["embedding"].astype(f32), tok_tb, axis=0)        # [T, B, H]

    cmd_len = jnp.asarray(commands_lengths, jnp.int32)
    mask_bias = jnp.where(jnp.arange(Mc)[None, :] < cmd_len[:, None],
                          0.0, -1e30).astype(f32)                              # [B, Mc]
    hc0 = jnp.stack([init_hidden[0][0], init_hidden[1][0]], axis=0).astype(f32)  # [2, B, H]

    # key-layer projections (time-invariant)
    pk_txt = jnp.einsum("mbh,kh->bmk", encoded_commands,
                        params["w_tk"]).astype(mxu_dtype)                      # [B, Mc, H]
    pk_vis = jnp.einsum("bmf,kf->bmk", encoded_situations,
                        params["w_vk"]).astype(mxu_dtype)                      # [B, Ms, H]

    # fused / packed weights (fewer DMA streams, fewer MXU pushes per step)
    w_q = jnp.concatenate([params["w_tq"].T, params["w_vq"].T],
                          axis=1).astype(mxu_dtype)                            # [H, 2H]
    w_e = jnp.concatenate([params["w_te"], params["w_ve"]], axis=0).astype(mxu_dtype)  # [2, H]
    w_lstm = jnp.concatenate([params["w_ih"].T, params["w_hh"].T],
                             axis=0).astype(mxu_dtype)                         # [4H, 4H]
    b_lstm = (params["b_ih"] + params["b_hh"]).reshape(1, 4 * H).astype(f32)   # [1, 4H]
    w_out = params["w_o2h"].T.astype(mxu_dtype)                                # [4H, H]
    w_h2o = params["w_h2o"].T.astype(mxu_dtype)                                # [H, V]

    args = (emb_seq, mask_bias, hc0, pk_txt, pk_vis, w_q, w_e, w_lstm, b_lstm, w_out)

    def const_spec(shape):
        nz = (0,) * len(shape)
        return pl.BlockSpec(shape, lambda t, _z=nz: _z)   # resident across all t

    in_specs = [
        pl.BlockSpec((1, B, H), lambda t: (t, 0, 0)),     # emb_seq : streamed per step
        const_spec(mask_bias.shape),
        const_spec(hc0.shape),
        const_spec(pk_txt.shape),
        const_spec(pk_vis.shape),
        const_spec(w_q.shape),
        const_spec(w_e.shape),
        const_spec(w_lstm.shape),
        const_spec(b_lstm.shape),
        const_spec(w_out.shape),
    ]
    out_specs = [
        pl.BlockSpec((1, B, H), lambda t: (t, 0, 0)),     # pre_h : streamed per step
        const_spec((B, Ms)),                              # attn_sum : resident accumulator
    ]
    out_shape = [jax.ShapeDtypeStruct((T, B, H), f32),
                 jax.ShapeDtypeStruct((B, Ms), f32)]

    # scoped-VMEM budget from the real resident footprint (+ headroom / double buffers)
    nbytes = lambda a: a.size * a.dtype.itemsize
    const_bytes = sum(nbytes(a) for a in args[1:])
    stream_bytes = 2 * 2 * (B * H * 4)                    # emb block + pre_h block, 2-deep
    resident_bytes = const_bytes + stream_bytes + B * Ms * 4 + 2 * B * H * 4
    vmem_limit = int(min(max(2 * resident_bytes + (8 << 20), 16 << 20), 100 << 20))

    pre_h, attn_sum = pl.pallas_call(
        decoder_step_kernel,
        out_shape=out_shape,
        grid_spec=pltpu.PrefetchScalarGridSpec(
            num_scalar_prefetch=0,
            grid=(T,),                                    # serial recurrence over time
            in_specs=in_specs,
            out_specs=out_specs,
            scratch_shapes=[pltpu.VMEM((B, H), f32),      # h state
                            pltpu.VMEM((B, H), f32)]),    # c state
        compiler_params=pltpu.CompilerParams(
            dimension_semantics=("arbitrary",),
            vmem_limit_bytes=vmem_limit),
    )(*args)

    # --- separate tiled vocab projection: [T*B, H] x [H, V], lane-dense streamed output ---
    tn = 128 if V % 128 == 0 else V
    lstm_output = pl.pallas_call(
        vocab_proj_kernel,
        out_shape=jax.ShapeDtypeStruct((T, B, V), f32),
        grid_spec=pltpu.PrefetchScalarGridSpec(
            num_scalar_prefetch=0,
            grid=(T, V // tn),
            in_specs=[pl.BlockSpec((1, B, H), lambda t, j: (t, 0, 0)),
                      pl.BlockSpec((H, tn), lambda t, j: (0, j))],
            out_specs=pl.BlockSpec((1, B, tn), lambda t, j: (t, 0, j))),
        compiler_params=pltpu.CompilerParams(
            dimension_semantics=("parallel", "parallel")),
    )(pre_h, w_h2o)

    # sort/unsort-by-length in the reference is an exact inverse permutation -> identity
    seq_len = [int(l) for l in input_lengths]
    return lstm_output, seq_len, attn_sum


# --------------------------------------------------------------------------------------
# Pure-JAX mirror of the PyTorch forward for verification.
# --------------------------------------------------------------------------------------
def reference_forward(params, input_tokens, input_lengths, init_hidden,
                      encoded_commands, commands_lengths, encoded_situations):
    B, T = input_tokens.shape
    V, H = params["embedding"].shape
    pk_txt = jnp.einsum("mbh,kh->bmk", encoded_commands, params["w_tk"])
    pk_vis = jnp.einsum("bmf,kf->bmk", encoded_situations, params["w_vk"])
    h = init_hidden[0][0]
    c = init_hidden[1][0]
    cmd_len = jnp.asarray(commands_lengths)
    Mc, Ms = pk_txt.shape[1], pk_vis.shape[1]
    outs = []
    attn_sum = jnp.zeros((B, Ms), jnp.float32)
    for t in range(T):
        emb = params["embedding"][input_tokens[:, t]]
        q = h @ params["w_tq"].T
        s = jnp.einsum("bmh,h->bm", jnp.tanh(q[:, None, :] + pk_txt), params["w_te"][0])
        valid = jnp.arange(Mc)[None, :] < cmd_len[:, None]
        s = jnp.where(valid, s, -1e30)
        a = jax.nn.softmax(s, axis=-1)
        ctx_cmd = jnp.einsum("bm,bmh->bh", a, pk_txt)
        qv = h @ params["w_vq"].T
        sv = jnp.einsum("bmh,h->bm", jnp.tanh(qv[:, None, :] + pk_vis), params["w_ve"][0])
        av = jax.nn.softmax(sv, axis=-1)
        ctx_sit = jnp.einsum("bm,bmh->bh", av, pk_vis)
        x = jnp.concatenate([emb, ctx_cmd, ctx_sit], axis=-1)
        gates = (x @ params["w_ih"].T + params["b_ih"]
                 + h @ params["w_hh"].T + params["b_hh"])
        i_g = jax.nn.sigmoid(gates[:, :H])
        f_g = jax.nn.sigmoid(gates[:, H:2 * H])
        g_g = jnp.tanh(gates[:, 2 * H:3 * H])
        o_g = jax.nn.sigmoid(gates[:, 3 * H:])
        c = f_g * c + i_g * g_g
        h = o_g * jnp.tanh(c)
        pre = jnp.concatenate([emb, h, ctx_cmd, ctx_sit], axis=-1)
        outs.append((pre @ params["w_o2h"].T) @ params["w_h2o"].T)
        attn_sum = attn_sum + av
    return jnp.stack(outs, 0), [int(l) for l in input_lengths], attn_sum


if __name__ == "__main__":
    B, T, H, V = 2, 6, 32, 16          # batch, max target length, hidden, output vocab
    Mc, Ms, F = 8, 16, 16              # command length, 4x4 image cells, image features

    key = jax.random.PRNGKey(0)
    ks = jax.random.split(key, 20)
    sc = 0.1
    emb = sc * jax.random.normal(ks[0], (V, H), jnp.float32)
    emb = emb.at[0].set(0.0)           # padding_idx = 0 row zeroed (nn.Embedding semantics)
    params = dict(
        embedding=emb,
        w_tk=sc * jax.random.normal(ks[1], (H, H), jnp.float32),   # textual key_layer
        w_tq=sc * jax.random.normal(ks[2], (H, H), jnp.float32),   # textual query_layer
        w_te=sc * jax.random.normal(ks[3], (1, H), jnp.float32),   # textual energy_layer
        w_vk=sc * jax.random.normal(ks[4], (H, F), jnp.float32),   # visual key_layer
        w_vq=sc * jax.random.normal(ks[5], (H, H), jnp.float32),   # visual query_layer
        w_ve=sc * jax.random.normal(ks[6], (1, H), jnp.float32),   # visual energy_layer
        w_ih=sc * jax.random.normal(ks[7], (4 * H, 3 * H), jnp.float32),
        w_hh=sc * jax.random.normal(ks[8], (4 * H, H), jnp.float32),
        b_ih=sc * jax.random.normal(ks[9], (4 * H,), jnp.float32),
        b_hh=sc * jax.random.normal(ks[10], (4 * H,), jnp.float32),
        w_o2h=sc * jax.random.normal(ks[11], (H, 4 * H), jnp.float32),
        w_h2o=sc * jax.random.normal(ks[12], (V, H), jnp.float32),
    )

    input_tokens = jax.random.randint(ks[13], (B, T), 0, V).astype(jnp.int32)
    input_lengths = [T, T - 2]
    h0 = sc * jax.random.normal(ks[14], (1, B, H), jnp.float32)
    c0 = sc * jax.random.normal(ks[15], (1, B, H), jnp.float32)
    encoded_commands = sc * jax.random.normal(ks[16], (Mc, B, H), jnp.float32)
    commands_lengths = [Mc, Mc - 3]
    encoded_situations = sc * jax.random.normal(ks[17], (B, Ms, F), jnp.float32)

    lstm_out, seq_len, attn_sum = attention_decoder_forward(
        params, input_tokens, input_lengths, (h0, c0),
        encoded_commands, commands_lengths, encoded_situations)
    jax.block_until_ready((lstm_out, attn_sum))

    ref_out, ref_len, ref_attn = reference_forward(
        params, input_tokens, input_lengths, (h0, c0),
        encoded_commands, commands_lengths, encoded_situations)

    assert lstm_out.shape == (T, B, V) and attn_sum.shape == (B, Ms)
    assert seq_len == ref_len
    # all-f32 path (default mxu_dtype); remaining slack only covers the EUP approx
    # reciprocal (+NR step) in the softmax normalization.
    assert jnp.allclose(lstm_out, ref_out, rtol=1e-3, atol=1e-3)
    assert jnp.allclose(attn_sum, ref_attn, rtol=1e-3, atol=1e-3)
    print("KERNEL_OK")
</pallas_src>

<mosaic_0001>
module attributes {stable_mosaic.version = 11 : i64} {
  func.func @decoder_step_kernel(%arg0: i32, %arg1: memref<1x2x32xf32, #tpu.memory_space<vmem>>, %arg2: memref<2x8xf32, #tpu.memory_space<vmem>>, %arg3: memref<2x2x32xf32, #tpu.memory_space<vmem>>, %arg4: memref<2x8x32xf32, #tpu.memory_space<vmem>>, %arg5: memref<2x16x32xf32, #tpu.memory_space<vmem>>, %arg6: memref<32x64xf32, #tpu.memory_space<vmem>>, %arg7: memref<2x32xf32, #tpu.memory_space<vmem>>, %arg8: memref<128x128xf32, #tpu.memory_space<vmem>>, %arg9: memref<1x128xf32, #tpu.memory_space<vmem>>, %arg10: memref<128x32xf32, #tpu.memory_space<vmem>>, %arg11: memref<1x2x32xf32, #tpu.memory_space<vmem>>, %arg12: memref<2x16xf32, #tpu.memory_space<vmem>>, %arg13: memref<2x32xf32, #tpu.memory_space<vmem>>, %arg14: memref<2x32xf32, #tpu.memory_space<vmem>>) attributes {dimension_semantics = [#tpu.dimension_semantics<arbitrary>], iteration_bounds = array<i64: 6>, scalar_prefetch = 0 : i64, scratch_operands = 2 : i64, tpu.core_type = #tpu.core_type<tc>, window_params = [{transform_indices = @transform_0, window_bounds = array<i64: 1, 2, 32>}, {pipeline_mode = #tpu.pipeline_mode<synchronous>, transform_indices = @transform_1, window_bounds = array<i64: 2, 8>}, {pipeline_mode = #tpu.pipeline_mode<synchronous>, transform_indices = @transform_2, window_bounds = array<i64: 2, 2, 32>}, {pipeline_mode = #tpu.pipeline_mode<synchronous>, transform_indices = @transform_3, window_bounds = array<i64: 2, 8, 32>}, {pipeline_mode = #tpu.pipeline_mode<synchronous>, transform_indices = @transform_4, window_bounds = array<i64: 2, 16, 32>}, {pipeline_mode = #tpu.pipeline_mode<synchronous>, transform_indices = @transform_5, window_bounds = array<i64: 32, 64>}, {pipeline_mode = #tpu.pipeline_mode<synchronous>, transform_indices = @transform_6, window_bounds = array<i64: 2, 32>}, {pipeline_mode = #tpu.pipeline_mode<synchronous>, transform_indices = @transform_7, window_bounds = array<i64: 128, 128>}, {pipeline_mode = #tpu.pipeline_mode<synchronous>, transform_indices = @transform_8, window_bounds = array<i64: 1, 128>}, {pipeline_mode = #tpu.pipeline_mode<synchronous>, transform_indices = @transform_9, window_bounds = array<i64: 128, 32>}, {transform_indices = @transform_10, window_bounds = array<i64: 1, 2, 32>}, {pipeline_mode = #tpu.pipeline_mode<synchronous>, transform_indices = @transform_11, window_bounds = array<i64: 2, 16>}]} {
    %c0_i32 = arith.constant 0 : i32
    %0 = arith.cmpi eq, %arg0, %c0_i32 : i32
    %1 = arith.extui %0 : i1 to i32
    %c0_i32_0 = arith.constant 0 : i32
    %2 = arith.cmpi ne, %1, %c0_i32_0 : i32
    scf.if %2 {
      %c0_52 = arith.constant 0 : index
      %c0_53 = arith.constant 0 : index
      %c0_54 = arith.constant 0 : index
      %113 = vector.load %arg3[%c0_52, %c0_53, %c0_54] : memref<2x2x32xf32, #tpu.memory_space<vmem>>, vector<1x2x32xf32>
      %114 = vector.shape_cast %113 : vector<1x2x32xf32> to vector<2x32xf32>
      %c0_55 = arith.constant 0 : index
      %c0_56 = arith.constant 0 : index
      %115 = vector.load %arg13[%c0_55, %c0_56] : memref<2x32xf32, #tpu.memory_space<vmem>>, vector<2x32xf32>
      tpu.vector_store %arg13[%c0_55, %c0_56], %114 {strides = array<i32>} : memref<2x32xf32, #tpu.memory_space<vmem>>, vector<2x32xf32>,
      %c1_57 = arith.constant 1 : index
      %c0_58 = arith.constant 0 : index
      %c0_59 = arith.constant 0 : index
      %116 = vector.load %arg3[%c1_57, %c0_58, %c0_59] : memref<2x2x32xf32, #tpu.memory_space<vmem>>, vector<1x2x32xf32>
      %117 = vector.shape_cast %116 : vector<1x2x32xf32> to vector<2x32xf32>
      %c0_60 = arith.constant 0 : index
      %c0_61 = arith.constant 0 : index
      %118 = vector.load %arg14[%c0_60, %c0_61] : memref<2x32xf32, #tpu.memory_space<vmem>>, vector<2x32xf32>
      tpu.vector_store %arg14[%c0_60, %c0_61], %117 {strides = array<i32>} : memref<2x32xf32, #tpu.memory_space<vmem>>, vector<2x32xf32>,
      %cst_62 = arith.constant 0.000000e+00 : f32
      %119 = vector.broadcast %cst_62 : f32 to vector<2x16xf32>
      %c0_63 = arith.constant 0 : index
      %c0_64 = arith.constant 0 : index
      %120 = vector.load %arg12[%c0_63, %c0_64] : memref<2x16xf32, #tpu.memory_space<vmem>>, vector<2x16xf32>
      tpu.vector_store %arg12[%c0_63, %c0_64], %119 {strides = array<i32>} : memref<2x16xf32, #tpu.memory_space<vmem>>, vector<2x16xf32>,
    } else {
    }
    %c0 = arith.constant 0 : index
    %c0_1 = arith.constant 0 : index
    %3 = vector.load %arg13[%c0, %c0_1] : memref<2x32xf32, #tpu.memory_space<vmem>>, vector<2x32xf32>
    %c0_2 = arith.constant 0 : index
    %c0_3 = arith.constant 0 : index
    %4 = vector.load %arg14[%c0_2, %c0_3] : memref<2x32xf32, #tpu.memory_space<vmem>>, vector<2x32xf32>
    %c0_4 = arith.constant 0 : index
    %c0_5 = arith.constant 0 : index
    %c0_6 = arith.constant 0 : index
    %5 = vector.load %arg1[%c0_4, %c0_5, %c0_6] : memref<1x2x32xf32, #tpu.memory_space<vmem>>, vector<1x2x32xf32>
    %6 = vector.shape_cast %5 : vector<1x2x32xf32> to vector<2x32xf32>
    %c0_7 = arith.constant 0 : index
    %c0_8 = arith.constant 0 : index
    %c0_9 = arith.constant 0 : index
    %7 = vector.load %arg4[%c0_7, %c0_8, %c0_9] : memref<2x8x32xf32, #tpu.memory_space<vmem>>, vector<2x8x32xf32>
    %c0_10 = arith.constant 0 : index
    %c0_11 = arith.constant 0 : index
    %c0_12 = arith.constant 0 : index
    %8 = vector.load %arg5[%c0_10, %c0_11, %c0_12] : memref<2x16x32xf32, #tpu.memory_space<vmem>>, vector<2x16x32xf32>
    %c0_13 = arith.constant 0 : index
    %c0_14 = arith.constant 0 : index
    %9 = vector.load %arg6[%c0_13, %c0_14] : memref<32x64xf32, #tpu.memory_space<vmem>>, vector<32x64xf32>
    %cst = arith.constant dense<0.000000e+00> : vector<2x64xf32>
    %10 = tpu.matmul %3, %9, %cst {dimension_numbers = #tpu.dot_dimension_numbers<[1], [0], [0], [1], [0, 0, 1, 1], [], []>} : vector<2x32xf32>, vector<32x64xf32>, vector<2x64xf32> -> vector<2x64xf32>
    %11 = vector.extract_strided_slice %10 {offsets = [0, 0], sizes = [2, 32], strides = [1, 1]} : vector<2x64xf32> to vector<2x32xf32>
    %12 = vector.extract_strided_slice %10 {offsets = [0, 32], sizes = [2, 32], strides = [1, 1]} : vector<2x64xf32> to vector<2x32xf32>
    %c0_15 = arith.constant 0 : index
    %c0_16 = arith.constant 0 : index
    %13 = vector.load %arg7[%c0_15, %c0_16] : memref<2x32xf32, #tpu.memory_space<vmem>>, vector<1x32xf32>
    %14 = vector.shape_cast %13 : vector<1x32xf32> to vector<32xf32>
    %15 = vector.shape_cast %14 : vector<32xf32> to vector<1x1x32xf32>
    %c1 = arith.constant 1 : index
    %c0_17 = arith.constant 0 : index
    %16 = vector.load %arg7[%c1, %c0_17] : memref<2x32xf32, #tpu.memory_space<vmem>>, vector<1x32xf32>
    %17 = vector.shape_cast %16 : vector<1x32xf32> to vector<32xf32>
    %18 = vector.shape_cast %17 : vector<32xf32> to vector<1x1x32xf32>
    %19 = vector.shape_cast %11 : vector<2x32xf32> to vector<2x1x32xf32>
    %20 = vector.broadcast %19 : vector<2x1x32xf32> to vector<2x8x32xf32>
    %21 = arith.addf %20, %7 : vector<2x8x32xf32>
    %22 = math.tanh %21 : vector<2x8x32xf32>
    %23 = vector.broadcast %15 : vector<1x1x32xf32> to vector<2x8x32xf32>
    %24 = arith.mulf %22, %23 : vector<2x8x32xf32>
    %cst_18 = arith.constant dense<0.000000e+00> : vector<2x8xf32>
    %25 = vector.multi_reduction <add>, %24, %cst_18 [2] : vector<2x8x32xf32> to vector<2x8xf32>
    %c0_19 = arith.constant 0 : index
    %c0_20 = arith.constant 0 : index
    %26 = vector.load %arg2[%c0_19, %c0_20] : memref<2x8xf32, #tpu.memory_space<vmem>>, vector<2x8xf32>
    %27 = arith.addf %25, %26 : vector<2x8xf32>
    %cst_21 = arith.constant dense<0xFF800000> : vector<2xf32>
    %28 = vector.multi_reduction <maximumf>, %27, %cst_21 [1] : vector<2x8xf32> to vector<2xf32>
    %29 = vector.shape_cast %28 : vector<2xf32> to vector<2x1xf32>
    %30 = vector.broadcast %29 : vector<2x1xf32> to vector<2x8xf32>
    %31 = arith.subf %27, %30 : vector<2x8xf32>
    %32 = math.exp %31 : vector<2x8xf32>
    %cst_22 = arith.constant dense<0.000000e+00> : vector<2xf32>
    %33 = vector.multi_reduction <add>, %32, %cst_22 [1] : vector<2x8xf32> to vector<2xf32>
    %34 = vector.shape_cast %33 : vector<2xf32> to vector<2x1xf32>
    %35 = tpu.reciprocal %34 {approx = true} : vector<2x1xf32> -> vector<2x1xf32>
    %36 = arith.mulf %34, %35 : vector<2x1xf32>
    %cst_23 = arith.constant 2.000000e+00 : f32
    %37 = vector.broadcast %cst_23 : f32 to vector<2x1xf32>
    %38 = arith.subf %37, %36 : vector<2x1xf32>
    %39 = arith.mulf %35, %38 : vector<2x1xf32>
    %40 = vector.broadcast %39 : vector<2x1xf32> to vector<2x8xf32>
    %41 = arith.mulf %32, %40 : vector<2x8xf32>
    %42 = vector.shape_cast %41 : vector<2x8xf32> to vector<2x8x1xf32>
    %43 = vector.broadcast %42 : vector<2x8x1xf32> to vector<2x8x32xf32>
    %44 = arith.mulf %43, %7 : vector<2x8x32xf32>
    %cst_24 = arith.constant dense<0.000000e+00> : vector<2x32xf32>
    %45 = vector.multi_reduction <add>, %44, %cst_24 [1] : vector<2x8x32xf32> to vector<2x32xf32>
    %46 = vector.shape_cast %12 : vector<2x32xf32> to vector<2x1x32xf32>
    %47 = vector.broadcast %46 : vector<2x1x32xf32> to vector<2x16x32xf32>
    %48 = arith.addf %47, %8 : vector<2x16x32xf32>
    %49 = math.tanh %48 : vector<2x16x32xf32>
    %50 = vector.broadcast %18 : vector<1x1x32xf32> to vector<2x16x32xf32>
    %51 = arith.mulf %49, %50 : vector<2x16x32xf32>
    %cst_25 = arith.constant dense<0.000000e+00> : vector<2x16xf32>
    %52 = vector.multi_reduction <add>, %51, %cst_25 [2] : vector<2x16x32xf32> to vector<2x16xf32>
    %cst_26 = arith.constant dense<0xFF800000> : vector<2xf32>
    %53 = vector.multi_reduction <maximumf>, %52, %cst_26 [1] : vector<2x16xf32> to vector<2xf32>
    %54 = vector.shape_cast %53 : vector<2xf32> to vector<2x1xf32>
    %55 = vector.broadcast %54 : vector<2x1xf32> to vector<2x16xf32>
    %56 = arith.subf %52, %55 : vector<2x16xf32>
    %57 = math.exp %56 : vector<2x16xf32>
    %cst_27 = arith.constant dense<0.000000e+00> : vector<2xf32>
    %58 = vector.multi_reduction <add>, %57, %cst_27 [1] : vector<2x16xf32> to vector<2xf32>
    %59 = vector.shape_cast %58 : vector<2xf32> to vector<2x1xf32>
    %60 = tpu.reciprocal %59 {approx = true} : vector<2x1xf32> -> vector<2x1xf32>
    %61 = arith.mulf %59, %60 : vector<2x1xf32>
    %cst_28 = arith.constant 2.000000e+00 : f32
    %62 = vector.broadcast %cst_28 : f32 to vector<2x1xf32>
    %63 = arith.subf %62, %61 : vector<2x1xf32>
    %64 = arith.mulf %60, %63 : vector<2x1xf32>
    %65 = vector.broadcast %64 : vector<2x1xf32> to vector<2x16xf32>
    %66 = arith.mulf %57, %65 : vector<2x16xf32>
    %67 = vector.shape_cast %66 : vector<2x16xf32> to vector<2x16x1xf32>
    %68 = vector.broadcast %67 : vector<2x16x1xf32> to vector<2x16x32xf32>
    %69 = arith.mulf %68, %8 : vector<2x16x32xf32>
    %cst_29 = arith.constant dense<0.000000e+00> : vector<2x32xf32>
    %70 = vector.multi_reduction <add>, %69, %cst_29 [1] : vector<2x16x32xf32> to vector<2x32xf32>
    %c0_30 = arith.constant 0 : index
    %c0_31 = arith.constant 0 : index
    %71 = vector.load %arg8[%c0_30, %c0_31] : memref<128x128xf32, #tpu.memory_space<vmem>>, vector<128x128xf32>
    %72 = tpu.concatenate %6, %45, %70, %3 in 1 : vector<2x32xf32>, vector<2x32xf32>, vector<2x32xf32>, vector<2x32xf32> -> vector<2x128xf32>
    %cst_32 = arith.constant dense<0.000000e+00> : vector<2x128xf32>
    %73 = tpu.matmul %72, %71, %cst_32 {dimension_numbers = #tpu.dot_dimension_numbers<[1], [0], [0], [1], [0, 0, 1, 1], [], []>} : vector<2x128xf32>, vector<128x128xf32>, vector<2x128xf32> -> vector<2x128xf32>
    %c0_33 = arith.constant 0 : index
    %c0_34 = arith.constant 0 : index
    %74 = vector.load %arg9[%c0_33, %c0_34] : memref<1x128xf32, #tpu.memory_space<vmem>>, vector<1x128xf32>
    %75 = vector.broadcast %74 : vector<1x128xf32> to vector<2x128xf32>
    %76 = arith.addf %73, %75 : vector<2x128xf32>
    %77 = vector.extract_strided_slice %76 {offsets = [0, 0], sizes = [2, 32], strides = [1, 1]} : vector<2x128xf32> to vector<2x32xf32>
    %78 = arith.negf %77 : vector<2x32xf32>
    %79 = math.exp %78 : vector<2x32xf32>
    %cst_35 = arith.constant 1.000000e+00 : f32
    %80 = vector.broadcast %cst_35 : f32 to vector<2x32xf32>
    %81 = arith.addf %80, %79 : vector<2x32xf32>
    %82 = arith.divf %80, %81 : vector<2x32xf32>
    %83 = vector.extract_strided_slice %76 {offsets = [0, 32], sizes = [2, 32], strides = [1, 1]} : vector<2x128xf32> to vector<2x32xf32>
    %84 = arith.negf %83 : vector<2x32xf32>
    %85 = math.exp %84 : vector<2x32xf32>
    %cst_36 = arith.constant 1.000000e+00 : f32
    %86 = vector.broadcast %cst_36 : f32 to vector<2x32xf32>
    %87 = arith.addf %86, %85 : vector<2x32xf32>
    %88 = arith.divf %86, %87 : vector<2x32xf32>
    %89 = vector.extract_strided_slice %76 {offsets = [0, 64], sizes = [2, 32], strides = [1, 1]} : vector<2x128xf32> to vector<2x32xf32>
    %90 = math.tanh %89 : vector<2x32xf32>
    %91 = vector.extract_strided_slice %76 {offsets = [0, 96], sizes = [2, 32], strides = [1, 1]} : vector<2x128xf32> to vector<2x32xf32>
    %92 = arith.negf %91 : vector<2x32xf32>
    %93 = math.exp %92 : vector<2x32xf32>
    %cst_37 = arith.constant 1.000000e+00 : f32
    %94 = vector.broadcast %cst_37 : f32 to vector<2x32xf32>
    %95 = arith.addf %94, %93 : vector<2x32xf32>
    %96 = arith.divf %94, %95 : vector<2x32xf32>
    %97 = arith.mulf %88, %4 : vector<2x32xf32>
    %98 = arith.mulf %82, %90 : vector<2x32xf32>
    %99 = arith.addf %97, %98 : vector<2x32xf32>
    %100 = math.tanh %99 : vector<2x32xf32>
    %101 = arith.mulf %96, %100 : vector<2x32xf32>
    %c0_38 = arith.constant 0 : index
    %c0_39 = arith.constant 0 : index
    %102 = vector.load %arg13[%c0_38, %c0_39] : memref<2x32xf32, #tpu.memory_space<vmem>>, vector<2x32xf32>
    tpu.vector_store %arg13[%c0_38, %c0_39], %101 {strides = array<i32>} : memref<2x32xf32, #tpu.memory_space<vmem>>, vector<2x32xf32>,
    %c0_40 = arith.constant 0 : index
    %c0_41 = arith.constant 0 : index
    %103 = vector.load %arg14[%c0_40, %c0_41] : memref<2x32xf32, #tpu.memory_space<vmem>>, vector<2x32xf32>
    tpu.vector_store %arg14[%c0_40, %c0_41], %99 {strides = array<i32>} : memref<2x32xf32, #tpu.memory_space<vmem>>, vector<2x32xf32>,
    %c0_42 = arith.constant 0 : index
    %c0_43 = arith.constant 0 : index
    %104 = vector.load %arg10[%c0_42, %c0_43] : memref<128x32xf32, #tpu.memory_space<vmem>>, vector<128x32xf32>
    %105 = tpu.concatenate %6, %101, %45, %70 in 1 : vector<2x32xf32>, vector<2x32xf32>, vector<2x32xf32>, vector<2x32xf32> -> vector<2x128xf32>
    %cst_44 = arith.constant dense<0.000000e+00> : vector<2x32xf32>
    %106 = tpu.matmul %105, %104, %cst_44 {dimension_numbers = #tpu.dot_dimension_numbers<[1], [0], [0], [1], [0, 0, 1, 1], [], []>} : vector<2x128xf32>, vector<128x32xf32>, vector<2x32xf32> -> vector<2x32xf32>
    %c0_45 = arith.constant 0 : index
    %c0_46 = arith.constant 0 : index
    %c0_47 = arith.constant 0 : index
    %107 = vector.load %arg11[%c0_45, %c0_46, %c0_47] : memref<1x2x32xf32, #tpu.memory_space<vmem>>, vector<1x2x32xf32>
    %108 = vector.shape_cast %107 : vector<1x2x32xf32> to vector<2x32xf32>
    %109 = vector.shape_cast %106 : vector<2x32xf32> to vector<1x2x32xf32>
    tpu.vector_store %arg11[%c0_45, %c0_46, %c0_47], %109 {strides = array<i32>} : memref<1x2x32xf32, #tpu.memory_space<vmem>>, vector<1x2x32xf32>,
    %c0_48 = arith.constant 0 : index
    %c0_49 = arith.constant 0 : index
    %110 = vector.load %arg12[%c0_48, %c0_49] : memref<2x16xf32, #tpu.memory_space<vmem>>, vector<2x16xf32>
    %111 = arith.addf %110, %66 : vector<2x16xf32>
    %c0_50 = arith.constant 0 : index
    %c0_51 = arith.constant 0 : index
    %112 = vector.load %arg12[%c0_50, %c0_51] : memref<2x16xf32, #tpu.memory_space<vmem>>, vector<2x16xf32>
    tpu.vector_store %arg12[%c0_50, %c0_51], %111 {strides = array<i32>} : memref<2x16xf32, #tpu.memory_space<vmem>>, vector<2x16xf32>,
    return
  }
  func.func @transform_0(%arg0: i32) -> (i32, i32, i32) {
    %c0_i32 = arith.constant 0 : i32
    %c0_i32_0 = arith.constant 0 : i32
    %c0_i32_1 = arith.constant 0 : i32
    return %arg0, %c0_i32, %c0_i32_0 : i32, i32, i32
  }
  func.func @transform_1(%arg0: i32) -> (i32, i32) {
    %c0_i32 = arith.constant 0 : i32
    %c0_i32_0 = arith.constant 0 : i32
    %c0_i32_1 = arith.constant 0 : i32
    return %c0_i32, %c0_i32_0 : i32, i32
  }
  func.func @transform_2(%arg0: i32) -> (i32, i32, i32) {
    %c0_i32 = arith.constant 0 : i32
    %c0_i32_0 = arith.constant 0 : i32
    %c0_i32_1 = arith.constant 0 : i32
    %c0_i32_2 = arith.constant 0 : i32
    return %c0_i32, %c0_i32_0, %c0_i32_1 : i32, i32, i32
  }
  func.func @transform_3(%arg0: i32) -> (i32, i32, i32) {
    %c0_i32 = arith.constant 0 : i32
    %c0_i32_0 = arith.constant 0 : i32
    %c0_i32_1 = arith.constant 0 : i32
    %c0_i32_2 = arith.constant 0 : i32
    return %c0_i32, %c0_i32_0, %c0_i32_1 : i32, i32, i32
  }
  func.func @transform_4(%arg0: i32) -> (i32, i32, i32) {
    %c0_i32 = arith.constant 0 : i32
    %c0_i32_0 = arith.constant 0 : i32
    %c0_i32_1 = arith.constant 0 : i32
    %c0_i32_2 = arith.constant 0 : i32
    return %c0_i32, %c0_i32_0, %c0_i32_1 : i32, i32, i32
  }
  func.func @transform_5(%arg0: i32) -> (i32, i32) {
    %c0_i32 = arith.constant 0 : i32
    %c0_i32_0 = arith.constant 0 : i32
    %c0_i32_1 = arith.constant 0 : i32
    return %c0_i32, %c0_i32_0 : i32, i32
  }
  func.func @transform_6(%arg0: i32) -> (i32, i32) {
    %c0_i32 = arith.constant 0 : i32
    %c0_i32_0 = arith.constant 0 : i32
    %c0_i32_1 = arith.constant 0 : i32
    return %c0_i32, %c0_i32_0 : i32, i32
  }
  func.func @transform_7(%arg0: i32) -> (i32, i32) {
    %c0_i32 = arith.constant 0 : i32
    %c0_i32_0 = arith.constant 0 : i32
    %c0_i32_1 = arith.constant 0 : i32
    return %c0_i32, %c0_i32_0 : i32, i32
  }
  func.func @transform_8(%arg0: i32) -> (i32, i32) {
    %c0_i32 = arith.constant 0 : i32
    %c0_i32_0 = arith.constant 0 : i32
    %c0_i32_1 = arith.constant 0 : i32
    return %c0_i32, %c0_i32_0 : i32, i32
  }
  func.func @transform_9(%arg0: i32) -> (i32, i32) {
    %c0_i32 = arith.constant 0 : i32
    %c0_i32_0 = arith.constant 0 : i32
    %c0_i32_1 = arith.constant 0 : i32
    return %c0_i32, %c0_i32_0 : i32, i32
  }
  func.func @transform_10(%arg0: i32) -> (i32, i32, i32) {
    %c0_i32 = arith.constant 0 : i32
    %c0_i32_0 = arith.constant 0 : i32
    %c0_i32_1 = arith.constant 0 : i32
    return %arg0, %c0_i32, %c0_i32_0 : i32, i32, i32
  }
  func.func @transform_11(%arg0: i32) -> (i32, i32) {
    %c0_i32 = arith.constant 0 : i32
    %c0_i32_0 = arith.constant 0 : i32
    %c0_i32_1 = arith.constant 0 : i32
    return %c0_i32, %c0_i32_0 : i32, i32
  }
}

</mosaic_0001>

<llo_original>
// kernel: tpu_custom_call.1
$region0: #{tpu_custom_call.1}
  #allocation0 [shape = 'u32[]', space=smem, size = 0x4, offset = 0x4, fixed_abs, tag = 'smem constant byte address 0x4 - core index']
  #allocation1 [shape = 'u32[144,128]{1,0:T(1,128)}', space=vmem, size = 0x12000, scoped, tag = 'internal scratch']
  #allocation2 [shape = 'f32[2,32]{1,0:T(2,128)}', space=vmem, size = 0x400, scoped, tag = 'scratch operand']
  #allocation3 [shape = 'f32[2,32]{1,0:T(2,128)}', space=vmem, size = 0x400, scoped, tag = 'scratch operand']
  %s0 = inlined_call_operand.vmem [shape: f32[6,2,32], index: 0, kind: input, shape index: {}]
  %s1 = inlined_call_operand.hbm [shape: f32[2,8], index: 1, kind: input, shape index: {}]
  %s2 = inlined_call_operand.hbm [shape: f32[2,2,32], index: 2, kind: input, shape index: {}]
  %s3 = inlined_call_operand.hbm [shape: f32[2,8,32], index: 3, kind: input, shape index: {}]
  %s4 = inlined_call_operand.vmem [shape: f32[2,16,32], index: 4, kind: input, shape index: {}]
  %s5 = inlined_call_operand.hbm [shape: f32[32,64], index: 5, kind: input, shape index: {}]
  %s6 = inlined_call_operand.hbm [shape: f32[2,32], index: 6, kind: input, shape index: {}]
  %s7 = inlined_call_operand.vmem [shape: f32[128,128], index: 7, kind: input, shape index: {}]
  %s8 = inlined_call_operand.vmem [shape: f32[1,128], index: 8, kind: input, shape index: {}]
  %s9 = inlined_call_operand.vmem [shape: f32[128,32], index: 9, kind: input, shape index: {}]
  %s10 = inlined_call_operand.hbm [shape: f32[6,2,32], index: 10, kind: output, shape index: {0}]
  %s11 = inlined_call_operand.hbm [shape: f32[2,16], index: 11, kind: output, shape index: {1}]
  %12 = xla_tuple %s10, %s11
  %s13 = sld [smem:[#allocation0]]
  $region105: #{tpu_custom_call.1} parent=0
    _
  %s15 = ssub.s32 1, %s13
  %s16 = scalar_select 0, %s15, %s13
  $region1: #{tpu_custom_call.1} parent=0
    #allocation4 [shape = 'u8[1024]{0}', space=vmem, size = 0x400, scoped, tag = 'input window, operand 1, single buffered']
    #allocation5 [shape = 's32[2]{0}', space=sflag, size = 0x8, scoped, tag = 'scoped memory for tpu_custom_call.1']
    #allocation6 [shape = 's32[2]{0}', space=sflag, size = 0x8, scoped, tag = 'scoped memory for tpu_custom_call.1']
    #allocation7 [shape = 'u8[2048]{0}', space=vmem, size = 0x800, scoped, tag = 'input window, operand 2, single buffered']
    #allocation8 [shape = 's32[1]{0}', space=sflag, size = 0x4, scoped, tag = 'scoped memory for tpu_custom_call.1']
    #allocation9 [shape = 'u8[8192]{0}', space=vmem, size = 0x2000, scoped, tag = 'input window, operand 3, single buffered']
    #allocation10 [shape = 'u8[16384]{0}', space=vmem, size = 0x4000, scoped, tag = 'input window, operand 5, single buffered']
    #allocation11 [shape = 's32[1]{0}', space=sflag, size = 0x4, scoped, tag = 'scoped memory for tpu_custom_call.1']
    #allocation12 [shape = 'u8[1024]{0}', space=vmem, size = 0x400, scoped, tag = 'input window, operand 6, single buffered']
    #allocation13 [shape = 'u8[2048]{0}', space=vmem, size = 0x800, scoped, tag = 'output window, operand 0']
    #allocation14 [shape = 'u8[1024]{0}', space=vmem, size = 0x400, scoped, tag = 'output window, operand 1, single buffered']
    #allocation15 [shape = 's32[1]{0}', space=sflag, size = 0x4, scoped, tag = 'scoped memory for tpu_custom_call.1']
    %17 = vsyncpa [#allocation5], 0
    %18 = vsyncpa [#allocation8], 0
    %19 = vsyncpa [#allocation11], 0
    %20 = vsyncpa [#allocation6], 0
    %s21 = scalar_lea.sflag [#allocation6], 1
    %22 = vsyncpa %s21, 0
    %23 = vsyncpa [#allocation15], 0
    loop: start=0, step=1, limit=8
    $region2: #{tpu_custom_call.1} parent=1 // loop_pre_header
      _
    $region3: #{tpu_custom_call.1} parent=1 // loop_header
      %s25 = sphi 0, %s29
      %p26 = scmp.ge.s32.totalorder %s25, 8
      %s35 = sphi 0, %s37
      %s38 = sphi 0, %s35
      %s39 = sphi 0, %s38
      %s55 = sphi 0, %s39
      %s59 = sphi 0, %s59
      %s61 = sphi 0, %s59
      %s62 = sphi 0, %s61
      %s76 = sphi 0, %s62
      %s80 = sphi 0, %s80
      %s82 = sphi 0, %s80
      %s83 = sphi 0, %s82
      %s97 = sphi 0, %s83
      %s101 = sphi 0, %s101
      %s103 = sphi 0, %s101
      %s104 = sphi 0, %s103
      %s118 = sphi 0, %s104
      %s122 = sphi 0, %s122
      %s124 = sphi 0, %s122
      %s125 = sphi 0, %s124
      %s139 = sphi 0, %s125
      %s143 = sphi 0, %s143
      %s145 = sphi 0, %s143
      %s146 = sphi 0, %s145
      %s160 = sphi 0, %s146
      %s164 = sphi 0, %s164
      %s166 = sphi 0, %s164
      %s167 = sphi 0, %s166
      %s181 = sphi 0, %s167
      %s185 = sphi 0, %s185
      %s187 = sphi 0, %s185
      %s188 = sphi 0, %s187
      %s202 = sphi 0, %s188
      %s206 = sphi 0, %s206
      %s208 = sphi 0, %s206
      %s209 = sphi 0, %s208
      %s223 = sphi 0, %s209
      %s227 = sphi 0, %s227
      %s229 = sphi 0, %s227
      %s230 = sphi 0, %s229
      %s244 = sphi 0, %s230
      %s250 = sphi 0, %s252
      %s253 = sphi 0, %s250
      %s254 = sphi 0, %s253
      %s270 = sphi 0, %s254
      %s274 = sphi 0, %s274
      %s276 = sphi 0, %s274
      %s277 = sphi 0, %s276
      %s291 = sphi 0, %s277
    $region4: #{tpu_custom_call.1} parent=1 // loop_header_branch
      %28 = sbr.rel (%p26) target = $region8
    $region5: #{tpu_custom_call.1} parent=1 // loop_body
      %s30 = ssub.s32 %s25, 1
      %s31 = ssub.s32 %s25, 2
      %s32 = sadd.s32 %s25, 1
      %s33 = ssub.s32 %s25, %s32
      %p34 = scmp.eq.s32.totalorder %s33, 0
      %s36 = sadd.s32 %s35, 1
      %s37 = scalar_select %p34, %s35, %s36
      %p40 = pneg %p34
      %p41 = scmp.eq.s32.totalorder %s25, 5
      %p42 = por %p40, %p41
      %p43 = scmp.ne.s32.totalorder %s35, %s38
      %p44 = scmp.eq.s32.totalorder %s25, 0
      %p45 = por %p43, %p44
      %p46 = scmp.ne.s32.totalorder %s35, %s38
      %p47 = scmp.eq.s32.totalorder %s30, 5
      %p48 = por %p46, %p47
      %p49 = scmp.ne.s32.totalorder %s38, %s39
      %p50 = scmp.eq.s32.totalorder %s30, 0
      %p51 = por %p49, %p50
      %p52 = scmp.ne.s32.totalorder %s38, %s39
      %p53 = scmp.eq.s32.totalorder %s31, 5
      %p54 = por %p52, %p53
      %p56 = scmp.ne.s32.totalorder %s39, %s55
      %p57 = scmp.eq.s32.totalorder %s31, 0
      %p58 = por %p56, %p57
      %s60 = sadd.s32 %s59, 1
      %p63 = scmp.eq.s32.totalorder %s25, 5
      %p64 = scmp.ne.s32.totalorder %s59, %s61
      %p65 = scmp.eq.s32.totalorder %s25, 0
      %p66 = por %p64, %p65
      %p67 = scmp.ne.s32.totalorder %s59, %s61
      %p68 = scmp.eq.s32.totalorder %s30, 5
      %p69 = por %p67, %p68
      %p70 = scmp.ne.s32.totalorder %s61, %s62
      %p71 = scmp.eq.s32.totalorder %s30, 0
      %p72 = por %p70, %p71
      %p73 = scmp.ne.s32.totalorder %s61, %s62
      %p74 = scmp.eq.s32.totalorder %s31, 5
      %p75 = por %p73, %p74
      %p77 = scmp.ne.s32.totalorder %s62, %s76
      %p78 = scmp.eq.s32.totalorder %s31, 0
      %p79 = por %p77, %p78
      %s81 = sadd.s32 %s80, 1
      %p84 = scmp.eq.s32.totalorder %s25, 5
      %p85 = scmp.ne.s32.totalorder %s80, %s82
      %p86 = scmp.eq.s32.totalorder %s25, 0
      %p87 = por %p85, %p86
      %p88 = scmp.ne.s32.totalorder %s80, %s82
      %p89 = scmp.eq.s32.totalorder %s30, 5
      %p90 = por %p88, %p89
      %p91 = scmp.ne.s32.totalorder %s82, %s83
      %p92 = scmp.eq.s32.totalorder %s30, 0
      %p93 = por %p91, %p92
      %p94 = scmp.ne.s32.totalorder %s82, %s83
      %p95 = scmp.eq.s32.totalorder %s31, 5
      %p96 = por %p94, %p95
      %p98 = scmp.ne.s32.totalorder %s83, %s97
      %p99 = scmp.eq.s32.totalorder %s31, 0
      %p100 = por %p98, %p99
      %s102 = sadd.s32 %s101, 1
      %p105 = scmp.eq.s32.totalorder %s25, 5
      %p106 = scmp.ne.s32.totalorder %s101, %s103
      %p107 = scmp.eq.s32.totalorder %s25, 0
      %p108 = por %p106, %p107
      %p109 = scmp.ne.s32.totalorder %s101, %s103
      %p110 = scmp.eq.s32.totalorder %s30, 5
      %p111 = por %p109, %p110
      %p112 = scmp.ne.s32.totalorder %s103, %s104
      %p113 = scmp.eq.s32.totalorder %s30, 0
      %p114 = por %p112, %p113
      %p115 = scmp.ne.s32.totalorder %s103, %s104
      %p116 = scmp.eq.s32.totalorder %s31, 5
      %p117 = por %p115, %p116
      %p119 = scmp.ne.s32.totalorder %s104, %s118
      %p120 = scmp.eq.s32.totalorder %s31, 0
      %p121 = por %p119, %p120
      %s123 = sadd.s32 %s122, 1
      %p126 = scmp.eq.s32.totalorder %s25, 5
      %p127 = scmp.ne.s32.totalorder %s122, %s124
      %p128 = scmp.eq.s32.totalorder %s25, 0
      %p129 = por %p127, %p128
      %p130 = scmp.ne.s32.totalorder %s122, %s124
      %p131 = scmp.eq.s32.totalorder %s30, 5
      %p132 = por %p130, %p131
      %p133 = scmp.ne.s32.totalorder %s124, %s125
      %p134 = scmp.eq.s32.totalorder %s30, 0
      %p135 = por %p133, %p134
      %p136 = scmp.ne.s32.totalorder %s124, %s125
      %p137 = scmp.eq.s32.totalorder %s31, 5
      %p138 = por %p136, %p137
      %p140 = scmp.ne.s32.totalorder %s125, %s139
      %p141 = scmp.eq.s32.totalorder %s31, 0
      %p142 = por %p140, %p141
      %s144 = sadd.s32 %s143, 1
      %p147 = scmp.eq.s32.totalorder %s25, 5
      %p148 = scmp.ne.s32.totalorder %s143, %s145
      %p149 = scmp.eq.s32.totalorder %s25, 0
      %p150 = por %p148, %p149
      %p151 = scmp.ne.s32.totalorder %s143, %s145
      %p152 = scmp.eq.s32.totalorder %s30, 5
      %p153 = por %p151, %p152
      %p154 = scmp.ne.s32.totalorder %s145, %s146
      %p155 = scmp.eq.s32.totalorder %s30, 0
      %p156 = por %p154, %p155
      %p157 = scmp.ne.s32.totalorder %s145, %s146
      %p158 = scmp.eq.s32.totalorder %s31, 5
      %p159 = por %p157, %p158
      %p161 = scmp.ne.s32.totalorder %s146, %s160
      %p162 = scmp.eq.s32.totalorder %s31, 0
      %p163 = por %p161, %p162
      %s165 = sadd.s32 %s164, 1
      %p168 = scmp.eq.s32.totalorder %s25, 5
      %p169 = scmp.ne.s32.totalorder %s164, %s166
      %p170 = scmp.eq.s32.totalorder %s25, 0
      %p171 = por %p169, %p170
      %p172 = scmp.ne.s32.totalorder %s164, %s166
      %p173 = scmp.eq.s32.totalorder %s30, 5
      %p174 = por %p172, %p173
      %p175 = scmp.ne.s32.totalorder %s166, %s167
      %p176 = scmp.eq.s32.totalorder %s30, 0
      %p177 = por %p175, %p176
      %p178 = scmp.ne.s32.totalorder %s166, %s167
      %p179 = scmp.eq.s32.totalorder %s31, 5
      %p180 = por %p178, %p179
      %p182 = scmp.ne.s32.totalorder %s167, %s181
      %p183 = scmp.eq.s32.totalorder %s31, 0
      %p184 = por %p182, %p183
      %s186 = sadd.s32 %s185, 1
      %p189 = scmp.eq.s32.totalorder %s25, 5
      %p190 = scmp.ne.s32.totalorder %s185, %s187
      %p191 = scmp.eq.s32.totalorder %s25, 0
      %p192 = por %p190, %p191
      %p193 = scmp.ne.s32.totalorder %s185, %s187
      %p194 = scmp.eq.s32.totalorder %s30, 5
      %p195 = por %p193, %p194
      %p196 = scmp.ne.s32.totalorder %s187, %s188
      %p197 = scmp.eq.s32.totalorder %s30, 0
      %p198 = por %p196, %p197
      %p199 = scmp.ne.s32.totalorder %s187, %s188
      %p200 = scmp.eq.s32.totalorder %s31, 5
      %p201 = por %p199, %p200
      %p203 = scmp.ne.s32.totalorder %s188, %s202
      %p204 = scmp.eq.s32.totalorder %s31, 0
      %p205 = por %p203, %p204
      %s207 = sadd.s32 %s206, 1
      %p210 = scmp.eq.s32.totalorder %s25, 5
      %p211 = scmp.ne.s32.totalorder %s206, %s208
      %p212 = scmp.eq.s32.totalorder %s25, 0
      %p213 = por %p211, %p212
      %p214 = scmp.ne.s32.totalorder %s206, %s208
      %p215 = scmp.eq.s32.totalorder %s30, 5
      %p216 = por %p214, %p215
      %p217 = scmp.ne.s32.totalorder %s208, %s209
      %p218 = scmp.eq.s32.totalorder %s30, 0
      %p219 = por %p217, %p218
      %p220 = scmp.ne.s32.totalorder %s208, %s209
      %p221 = scmp.eq.s32.totalorder %s31, 5
      %p222 = por %p220, %p221
      %p224 = scmp.ne.s32.totalorder %s209, %s223
      %p225 = scmp.eq.s32.totalorder %s31, 0
      %p226 = por %p224, %p225
      %s228 = sadd.s32 %s227, 1
      %p231 = scmp.eq.s32.totalorder %s25, 5
      %p232 = scmp.ne.s32.totalorder %s227, %s229
      %p233 = scmp.eq.s32.totalorder %s25, 0
      %p234 = por %p232, %p233
      %p235 = scmp.ne.s32.totalorder %s227, %s229
      %p236 = scmp.eq.s32.totalorder %s30, 5
      %p237 = por %p235, %p236
      %p238 = scmp.ne.s32.totalorder %s229, %s230
      %p239 = scmp.eq.s32.totalorder %s30, 0
      %p240 = por %p238, %p239
      %p241 = scmp.ne.s32.totalorder %s229, %s230
      %p242 = scmp.eq.s32.totalorder %s31, 5
      %p243 = por %p241, %p242
      %p245 = scmp.ne.s32.totalorder %s230, %s244
      %p246 = scmp.eq.s32.totalorder %s31, 0
      %p247 = por %p245, %p246
      %s248 = ssub.s32 %s25, %s32
      %p249 = scmp.eq.s32.totalorder %s248, 0
      %s251 = sadd.s32 %s250, 1
      %s252 = scalar_select %p249, %s250, %s251
      %p255 = pneg %p249
      %p256 = scmp.eq.s32.totalorder %s25, 5
      %p257 = por %p255, %p256
      %p258 = scmp.ne.s32.totalorder %s250, %s253
      %p259 = scmp.eq.s32.totalorder %s25, 0
      %p260 = por %p258, %p259
      %p261 = scmp.ne.s32.totalorder %s250, %s253
      %p262 = scmp.eq.s32.totalorder %s30, 5
      %p263 = por %p261, %p262
      %p264 = scmp.ne.s32.totalorder %s253, %s254
      %p265 = scmp.eq.s32.totalorder %s30, 0
      %p266 = por %p264, %p265
      %p267 = scmp.ne.s32.totalorder %s253, %s254
      %p268 = scmp.eq.s32.totalorder %s31, 5
      %p269 = por %p267, %p268
      %p271 = scmp.ne.s32.totalorder %s254, %s270
      %p272 = scmp.eq.s32.totalorder %s31, 0
      %p273 = por %p271, %p272
      %s275 = sadd.s32 %s274, 1
      %p278 = scmp.eq.s32.totalorder %s25, 5
      %p279 = scmp.ne.s32.totalorder %s274, %s276
      %p280 = scmp.eq.s32.totalorder %s25, 0
      %p281 = por %p279, %p280
      %p282 = scmp.ne.s32.totalorder %s274, %s276
      %p283 = scmp.eq.s32.totalorder %s30, 5
      %p284 = por %p282, %p283
      %p285 = scmp.ne.s32.totalorder %s276, %s277
      %p286 = scmp.eq.s32.totalorder %s30, 0
      %p287 = por %p285, %p286
      %p288 = scmp.ne.s32.totalorder %s276, %s277
      %p289 = scmp.eq.s32.totalorder %s31, 5
      %p290 = por %p288, %p289
      %p292 = scmp.ne.s32.totalorder %s277, %s291
      %p293 = scmp.eq.s32.totalorder %s31, 0
      %p294 = por %p292, %p293
      %p295 = scmp.le.s32.totalorder 1, %s25
      %p296 = scmp.lt.s32.totalorder %s25, 7
      %p297 = pnand %p295, %p296
      %p298 = pneg %p297
      // Predicated region
      $region9: #{tpu_custom_call.1} parent=5 // pred_check
        _
      $region10: #{tpu_custom_call.1} parent=5 // pred_check_branch
        %300 = sbr.rel (%p297) target = $region12
      $region11: #{tpu_custom_call.1} parent=5 // pred_region
        %s301 = ssub.s32 %s25, 1
        // Predicated region
        $region13: #{tpu_custom_call.1} parent=11 // pred_check
          %p302 = pneg %p72
        $region14: #{tpu_custom_call.1} parent=11 // pred_check_branch
          %304 = sbr.rel (%p302) target = $region16
        $region15: #{tpu_custom_call.1} parent=11 // pred_region
          %s306 = ssub.s32 32, 32
          %307 = vsyncadd [#allocation5], %s306
          %s309 = sshll.u32 [#allocation4], 4
          %s310 = int_to_ptr.vmem [resolvable:$true] %s309
          %312 = dma.hbm_to_vmem [thread:$0]  %s1, 32, %s310, [#allocation5]
        $region16: #{tpu_custom_call.1} parent=11 // pred_fallthru
          _
        // Predicated region
        $region17: #{tpu_custom_call.1} parent=11 // pred_check
          %p313 = pneg %p93
        $region18: #{tpu_custom_call.1} parent=11 // pred_check_branch
          %315 = sbr.rel (%p313) target = $region20
        $region19: #{tpu_custom_call.1} parent=11 // pred_region
          %s317 = ssub.s32 64, 64
          %318 = vsyncadd [#allocation8], %s317
          %s319 = sshll.u32 [#allocation7], 4
          %s320 = int_to_ptr.vmem [resolvable:$true] %s319
          %325 = dma.hbm_to_vmem [thread:$0]  %s2, 64, %s320, [#allocation8], 32, 32, 2
        $region20: #{tpu_custom_call.1} parent=11 // pred_fallthru
          _
        // Predicated region
        $region21: #{tpu_custom_call.1} parent=11 // pred_check
          %p326 = pneg %p114
        $region22: #{tpu_custom_call.1} parent=11 // pred_check_branch
          %328 = sbr.rel (%p326) target = $region24
        $region23: #{tpu_custom_call.1} parent=11 // pred_region
          %s330 = ssub.s32 256, 256
          %331 = vsyncadd [#allocation8], %s330
          %s332 = sshll.u32 [#allocation9], 4
          %s333 = int_to_ptr.vmem [resolvable:$true] %s332
          %338 = dma.hbm_to_vmem [thread:$0]  %s3, 256, %s333, [#allocation8], 128, 128, 8
        $region24: #{tpu_custom_call.1} parent=11 // pred_fallthru
          _
        // Predicated region
        $region25: #{tpu_custom_call.1} parent=11 // pred_check
          %p339 = pneg %p135
        $region26: #{tpu_custom_call.1} parent=11 // pred_check_branch
          %341 = sbr.rel (%p339) target = $region28
        $region27: #{tpu_custom_call.1} parent=11 // pred_region
          _
        $region28: #{tpu_custom_call.1} parent=11 // pred_fallthru
          _
        // Predicated region
        $region29: #{tpu_custom_call.1} parent=11 // pred_check
          %p342 = pneg %p156
        $region30: #{tpu_custom_call.1} parent=11 // pred_check_branch
          %344 = sbr.rel (%p342) target = $region32
        $region31: #{tpu_custom_call.1} parent=11 // pred_region
          %s346 = ssub.s32 512, 512
          %347 = vsyncadd [#allocation11], %s346
          %s348 = sshll.u32 [#allocation10], 4
          %s349 = int_to_ptr.vmem [resolvable:$true] %s348
          %354 = dma.hbm_to_vmem [thread:$0]  %s5, 512, %s349, [#allocation11], 128, 128, 8
        $region32: #{tpu_custom_call.1} parent=11 // pred_fallthru
          _
        // Predicated region
        $region33: #{tpu_custom_call.1} parent=11 // pred_check
          %p355 = pneg %p177
        $region34: #{tpu_custom_call.1} parent=11 // pred_check_branch
          %357 = sbr.rel (%p355) target = $region36
        $region35: #{tpu_custom_call.1} parent=11 // pred_region
          %s359 = ssub.s32 32, 32
          %360 = vsyncadd [#allocation11], %s359
          %s362 = sshll.u32 [#allocation12], 4
          %s363 = int_to_ptr.vmem [resolvable:$true] %s362
          %365 = dma.hbm_to_vmem [thread:$0]  %s6, 32, %s363, [#allocation11]
        $region36: #{tpu_custom_call.1} parent=11 // pred_fallthru
          _
        // Predicated region
        $region37: #{tpu_custom_call.1} parent=11 // pred_check
          %p366 = pneg %p198
        $region38: #{tpu_custom_call.1} parent=11 // pred_check_branch
          %368 = sbr.rel (%p366) target = $region40
        $region39: #{tpu_custom_call.1} parent=11 // pred_region
          _
        $region40: #{tpu_custom_call.1} parent=11 // pred_fallthru
          _
        // Predicated region
        $region41: #{tpu_custom_call.1} parent=11 // pred_check
          %p369 = pneg %p219
        $region42: #{tpu_custom_call.1} parent=11 // pred_check_branch
          %371 = sbr.rel (%p369) target = $region44
        $region43: #{tpu_custom_call.1} parent=11 // pred_region
          _
        $region44: #{tpu_custom_call.1} parent=11 // pred_fallthru
          _
        // Predicated region
        $region45: #{tpu_custom_call.1} parent=11 // pred_check
          %p372 = pneg %p240
        $region46: #{tpu_custom_call.1} parent=11 // pred_check_branch
          %374 = sbr.rel (%p372) target = $region48
        $region47: #{tpu_custom_call.1} parent=11 // pred_region
          _
        $region48: #{tpu_custom_call.1} parent=11 // pred_fallthru
          _
      $region12: #{tpu_custom_call.1} parent=5 // pred_fallthru
        _
      %p375 = scmp.lt.s32.totalorder %s25, 6
      // Predicated region
      $region49: #{tpu_custom_call.1} parent=5 // pred_check
        %p376 = pneg %p375
      $region50: #{tpu_custom_call.1} parent=5 // pred_check_branch
        %378 = sbr.rel (%p376) target = $region52
      $region51: #{tpu_custom_call.1} parent=5 // pred_region
        // Predicated region
        $region53: #{tpu_custom_call.1} parent=51 // pred_check
          %p379 = pneg %p45
        $region54: #{tpu_custom_call.1} parent=51 // pred_check_branch
          %381 = sbr.rel (%p379) target = $region56
        $region55: #{tpu_custom_call.1} parent=51 // pred_region
          %p382 = scmp.lt.s32.totalorder %s25, 5
          %s383 = scalar_select %p382, %s25, 5
          %s384 = smul.addr %s383, 2
          %s385 = scalar_lea.vmem %s0, %s384
        $region56: #{tpu_custom_call.1} parent=51 // pred_fallthru
          _
      $region52: #{tpu_custom_call.1} parent=5 // pred_fallthru
        _
      %p386 = scmp.le.s32.totalorder 1, %s25
      %p387 = scmp.lt.s32.totalorder %s25, 7
      %p388 = pnand %p386, %p387
      %p389 = pneg %p388
      // Predicated region
      $region57: #{tpu_custom_call.1} parent=5 // pred_check
        _
      $region58: #{tpu_custom_call.1} parent=5 // pred_check_branch
        %391 = sbr.rel (%p388) target = $region60
      $region59: #{tpu_custom_call.1} parent=5 // pred_region
        %s392 = ssub.s32 %s25, 1
        // Predicated region
        $region61: #{tpu_custom_call.1} parent=59 // pred_check
          %p393 = pneg %p72
        $region62: #{tpu_custom_call.1} parent=59 // pred_check_branch
          %395 = sbr.rel (%p393) target = $region64
        $region63: #{tpu_custom_call.1} parent=59 // pred_region
          %396 = dma.done [#allocation5], 32
        $region64: #{tpu_custom_call.1} parent=59 // pred_fallthru
          _
        // Predicated region
        $region65: #{tpu_custom_call.1} parent=59 // pred_check
          %p397 = pneg %p93
        $region66: #{tpu_custom_call.1} parent=59 // pred_check_branch
          %399 = sbr.rel (%p397) target = $region68
        $region67: #{tpu_custom_call.1} parent=59 // pred_region
          %400 = dma.done [#allocation8], 64
        $region68: #{tpu_custom_call.1} parent=59 // pred_fallthru
          _
        // Predicated region
        $region69: #{tpu_custom_call.1} parent=59 // pred_check
          %p401 = pneg %p114
        $region70: #{tpu_custom_call.1} parent=59 // pred_check_branch
          %403 = sbr.rel (%p401) target = $region72
        $region71: #{tpu_custom_call.1} parent=59 // pred_region
          %404 = dma.done [#allocation8], 256
        $region72: #{tpu_custom_call.1} parent=59 // pred_fallthru
          _
        // Predicated region
        $region73: #{tpu_custom_call.1} parent=59 // pred_check
          %p405 = pneg %p156
        $region74: #{tpu_custom_call.1} parent=59 // pred_check_branch
          %407 = sbr.rel (%p405) target = $region76
        $region75: #{tpu_custom_call.1} parent=59 // pred_region
          %408 = dma.done [#allocation11], 512
        $region76: #{tpu_custom_call.1} parent=59 // pred_fallthru
          _
        // Predicated region
        $region77: #{tpu_custom_call.1} parent=59 // pred_check
          %p409 = pneg %p177
        $region78: #{tpu_custom_call.1} parent=59 // pred_check_branch
          %411 = sbr.rel (%p409) target = $region80
        $region79: #{tpu_custom_call.1} parent=59 // pred_region
          %412 = dma.done [#allocation11], 32
        $region80: #{tpu_custom_call.1} parent=59 // pred_fallthru
          _
        %p413 = scmp.lt.s32.totalorder %s30, 5
        %s414 = scalar_select %p413, %s30, 5
        %s415 = smul.addr %s414, 2
        %s416 = scalar_lea.vmem %s0, %s415
        %p417 = pneg %p51
        %p418 = pneg %p48
        %p419 = pneg %p72
        %p420 = pneg %p69
        %p421 = pneg %p93
        %p422 = pneg %p90
        %p423 = pneg %p114
        %p424 = pneg %p111
        %p425 = pneg %p135
        %p426 = pneg %p132
        %p427 = pneg %p156
        %p428 = pneg %p153
        %p429 = pneg %p177
        %p430 = pneg %p174
        %p431 = pneg %p198
        %p432 = pneg %p195
        %p433 = pneg %p219
        %p434 = pneg %p216
        %p435 = pneg %p240
        %p436 = pneg %p237
        %p437 = pneg %p266
        %p438 = pneg %p263
        %s439 = sand.u32 %s253, 1
        %s440 = scalar_lea.sflag [#allocation6], %s439
        %s441 = sand.u32 %s253, 1
        %s442 = smul.addr %s441, 2
        %s443 = scalar_lea.vmem [#allocation13], %s442
        %p444 = pneg %p287
        %p445 = pneg %p284
        %p446 = scmp.lt.s32.totalorder %s30, 5
        %s447 = scalar_select %p446, %s30, 5
        %s448 = smul.addr %s447, 2
        %s449 = scalar_lea.vmem %s0, %s448
        %p450 = scmp.eq.s32.totalorder %s30, 0
        // Predicated region
        $region81: #{tpu_custom_call.1} parent=59 // pred_check
          %p451 = pneg %p450
        $region82: #{tpu_custom_call.1} parent=59 // pred_check_branch
          %453 = sbr.rel (%p451) target = $region84
        $region83: #{tpu_custom_call.1} parent=59 // pred_region
          %v454 = vld [vmem:[#allocation7] sm:$0x3]
          %vm455 = vcmask 254976
          %456 = vst.msk [vmem:[#allocation2] sm:$0x3] %vm455, %v454
          %s457 = scalar_lea.vmem [#allocation7], 2
          %v458 = vld [vmem:[%s457] sm:$0x3]
          %459 = vst.msk [vmem:[#allocation3] sm:$0x3] %vm455, %v458
          %vm460 = vcmask 123904
          %461 = vst.msk [vmem:[#allocation14] sm:$0x3] %vm460, 0.0
        $region84: #{tpu_custom_call.1} parent=59 // pred_fallthru
          _
        %v462 = vld [vmem:[#allocation2] sm:$0x3]
        %v463 = vld [vmem:[#allocation3] sm:$0x3]
        %v464 = vld [vmem:[%s449] sm:$0x3]
        %v465 = vld [vmem:[#allocation9] sm:$0xff]
        %v466 = vld [vmem:[#allocation9 + $0x8] sm:$0xff]
        %v467 = vld [vmem:[%s4] sm:$0xff]
        %v468 = vld [vmem:[%s4 + $0x8] sm:$0xff]
        %v469 = vld [vmem:[%s4 + $0x10] sm:$0xff]
        %v470 = vld [vmem:[%s4 + $0x18] sm:$0xff]
        %v471 = vld [vmem:[#allocation10] sm:$0xff]
        %v472 = vld [vmem:[#allocation10 + $0x8] sm:$0xff]
        %v473 = vld [vmem:[#allocation10 + $0x10] sm:$0xff]
        %v474 = vld [vmem:[#allocation10 + $0x18] sm:$0xff]
        %vm475 = vcmask 261120
        %v477 = vsel %vm475, %v462, 0
        %479 = vmatprep.subr.mxu0 0.0
        %480 = vmatpush1.msra.mxu0 0.0
        %481 = vmatprep.subr.mxu0 0.0
        %482 = vmatpush1.msra.mxu0 0.0
        %483 = vmatprep.subr.mxu0 0.0
        %484 = vmatpush1.msra.mxu0 0.0
        %485 = vmatprep.subr.mxu0 0.0
        %486 = vmatpush1.msra.mxu0 0.0
        %487 = vmatprep.subr.mxu0 0.0
        %488 = vmatpush1.msra.mxu0 0.0
        %489 = vmatprep.subr.mxu0 0.0
        %490 = vmatpush1.msra.mxu0 0.0
        %491 = vmatprep.subr.mxu0 0.0
        %492 = vmatpush1.msra.mxu0 0.0
        %493 = vmatprep.subr.mxu0 0.0
        %494 = vmatpush1.msra.mxu0 0.0
        %495 = vmatprep.subr.mxu0 0.0
        %496 = vmatpush1.msra.mxu0 0.0
        %497 = vmatprep.subr.mxu0 0.0
        %498 = vmatpush1.msra.mxu0 0.0
        %499 = vmatprep.subr.mxu0 0.0
        %500 = vmatpush1.msra.mxu0 0.0
        %501 = vmatprep.subr.mxu0 0.0
        %502 = vmatpush1.msra.mxu0 0.0
        %503 = vmatprep.subr.mxu0 0.0
        %504 = vmatpush1.msra.mxu0 %v474
        %505 = vmatprep.subr.mxu0 0.0
        %506 = vmatpush1.msra.mxu0 %v473
        %507 = vmatprep.subr.mxu0 0.0
        %508 = vmatpush1.msra.mxu0 %v472
        %509 = vmatprep.subr.mxu0 0.0
        %510 = vmatpush1.msra.mxu0 %v471
        %511 = vmatprep.subr.mxu0 0.0
        %512 = vmatpush2.msra.mxu0 0.0
        %513 = vmatprep.subr.mxu0 0.0
        %514 = vmatpush2.msra.mxu0 0.0
        %515 = vmatprep.subr.mxu0 0.0
        %516 = vmatpush2.msra.mxu0 0.0
        %517 = vmatprep.subr.mxu0 0.0
        %518 = vmatpush2.msra.mxu0 0.0
        %519 = vmatprep.subr.mxu0 0.0
        %520 = vmatpush2.msra.mxu0 0.0
        %521 = vmatprep.subr.mxu0 0.0
        %522 = vmatpush2.msra.mxu0 0.0
        %523 = vmatprep.subr.mxu0 0.0
        %524 = vmatpush2.msra.mxu0 0.0
        %525 = vmatprep.subr.mxu0 0.0
        %526 = vmatpush2.msra.mxu0 0.0
        %527 = vmatprep.subr.mxu0 0.0
        %528 = vmatpush2.msra.mxu0 0.0
        %529 = vmatprep.subr.mxu0 0.0
        %530 = vmatpush2.msra.mxu0 0.0
        %531 = vmatprep.subr.mxu0 0.0
        %532 = vmatpush2.msra.mxu0 0.0
        %533 = vmatprep.subr.mxu0 0.0
        %534 = vmatpush2.msra.mxu0 0.0
        %535 = vmatprep.subr.mxu0 0.0
        %536 = vmatpush2.msra.mxu0 0.0
        %537 = vmatprep.subr.mxu0 0.0
        %538 = vmatpush2.msra.mxu0 0.0
        %539 = vmatprep.subr.mxu0 0.0
        %540 = vmatpush2.msra.mxu0 0.0
        %541 = vmatprep.subr.mxu0 0.0
        %542 = vmatpush2.msra.mxu0 0.0
        %543 = vmatprep.mubr.f32.mxu0 0.0
        %544 = vmatmul.mubr.f32.gmra.mxu0 %v477
        %v545 = vpop.f32.mrf.mxu0
        %v546 = vadd.f32 0.0, %v545
        %v547 = vpop.f32.mrf.mxu0
        %548 = vdwg.mxu0
        %v549 = vld [vmem:[#allocation12] sm:$0x1]
        %v550 = vld [vmem:[#allocation12 + $0x1] sm:$0x1]
        %v553 = vunpack.c.l.s4 1966171168
        %v554 = vunpack.c.0.s8 %v553
        %v555 = vlaneseq
        %v556 = vshrl.u32 %v555, 7
        %v557 = vsub.s32 %v554, %v556
        %v558 = vrot.slane %v546, %v557
        %v559 = vcombine.high %v558, %v558
        %v561 = vunpack.c.l.s4 1966171168
        %v562 = vunpack.c.0.s8 %v561
        %v563 = vlaneseq
        %v564 = vshrl.u32 %v563, 7
        %v565 = vsub.s32 %v562, %v564
        %v566 = vrot.slane %v558, %v565
        %v568 = vunpack.c.l.s4 1966171168
        %v569 = vunpack.c.0.s8 %v568
        %v570 = vlaneseq
        %v571 = vshrl.u32 %v570, 7
        %v572 = vsub.s32 %v569, %v571
        %v573 = vrot.slane %v559, %v572
        %v574 = vlaneseq
        %v575 = vshrl.u32 %v574, 7
        %v576 = vsub.s32 0, %v575
        %v577 = vrot.slane %v566, %v576
        %v578 = vlaneseq
        %v579 = vshrl.u32 %v578, 7
        %v580 = vsub.s32 0, %v579
        %v581 = vrot.slane %v573, %v580
        %v584 = vadd.f32 %v577, %v465
        %v585 = vadd.f32 %v581, %v466
        %v586 = vtanh.pop %v584
        %v587 = vtanh.pop %v585
        %v588 = vlaneseq
        %v589 = vshrl.u32 %v588, 7
        %v590 = vsub.s32 0, %v589
        %v591 = vrot.slane %v549, %v590
        %v592 = vmul.f32 %v586, %v591
        %v593 = vmul.f32 %v587, %v591
        %v594 = vsel %vm475, %v592, 0.0
        %595 = vadd.xlane.f32.xlu0 %v594
        %v596 = vpop.xlane.xlu0 %595
        %v597 = vsel %vm475, %v593, 0.0
        %598 = vadd.xlane.f32.xlu0 %v597
        %v599 = vpop.xlane.xlu0 %598
        %v600 = vld [vmem:[#allocation4] sm:$0x3]
        %v602 = vlaneseq
        %v603 = vshrl.u32 %v602, 7
        %v604 = vsub.s32 0, %v603
        %v605 = vrot.slane %v600, %v604
        %607 = vbcast.lane.b32.xlu0 %v605, 256
        %v608 = vpop.permute.xlu0 %607
        %v609 = vlaneseq
        %v610 = vshrl.u32 %v609, 7
        %v611 = vsub.s32 1, %v610
        %v612 = vrot.slane %v600, %v611
        %614 = vbcast.lane.b32.xlu0 %v612, 256
        %v615 = vpop.permute.xlu0 %614
        %v618 = vadd.f32 %v596, %v608
        %v619 = vadd.f32 %v599, %v615
        %622 = vset.pattern.permute.xlu0 0
        %623 = vperm.xlu0 %622, %v618
        %v624 = vpop.permute.xlu0 %623
        %625 = vset.pattern.permute.xlu0 0
        %626 = vperm.xlu0 %625, %v619
        %v627 = vpop.permute.xlu0 %626
        %v628 = vlaneseq
        %v629 = vand.u32 %v628, 127
        %v630 = vlaneseq
        %v631 = vshrl.u32 %v630, 7
        %v632 = vsub.s32 %v629, %v631
        %v633 = vrot.slane %v624, %v632
        %v634 = vlaneseq
        %v635 = vshrl.u32 %v634, 7
        %v636 = vsub.s32 %v629, %v635
        %v637 = vrot.slane %v627, %v636
        %vm638 = vcmask 1041409
        %v639 = vsel %vm638, %v637, %v633
        %vm641 = vcmask 58368
        %v642 = vsel %vm641, %v639, -inf
        %643 = vmax.xlane.f32.xlu0 %v642
        %v644 = vpop.xlane.xlu0 %643
        %v646 = vlaneseq
        %v647 = vshrl.u32 %v646, 7
        %v648 = vsub.s32 0, %v647
        %v649 = vrot.slane %v644, %v648
        %v650 = vlaneseq
        %v651 = vshrl.u32 %v650, 7
        %v652 = vsub.s32 1, %v651
        %v653 = vrot.slane %v644, %v652
        %v656 = vsub.f32 %v618, %v649
        %v657 = vsub.f32 %v619, %v653
        %v658 = vmul.f32 %v656, 1.442695
        %v659 = vpow.pop %v658
        %v660 = vmul.f32 %v657, 1.442695
        %v661 = vpow.pop %v660
        %664 = vset.pattern.permute.xlu0 0
        %665 = vperm.xlu0 %664, %v659
        %v666 = vpop.permute.xlu0 %665
        %667 = vset.pattern.permute.xlu0 0
        %668 = vperm.xlu0 %667, %v661
        %v669 = vpop.permute.xlu0 %668
        %v670 = vlaneseq
        %v671 = vshrl.u32 %v670, 7
        %v672 = vsub.s32 %v629, %v671
        %v673 = vrot.slane %v666, %v672
        %v674 = vlaneseq
        %v675 = vshrl.u32 %v674, 7
        %v676 = vsub.s32 %v629, %v675
        %v677 = vrot.slane %v669, %v676
        %v678 = vsel %vm638, %v677, %v673
        %v680 = vsel %vm641, %v678, 0.0
        %681 = vadd.xlane.f32.xlu0 %v680
        %v682 = vpop.xlane.xlu0 %681
        %v683 = vrcp.pop %v682
        %v684 = vmul.f32 %v682, %v683
        %v685 = vsub.f32 2.0, %v684
        %v686 = vmul.f32 %v683, %v685
        %v688 = vlaneseq
        %v689 = vshrl.u32 %v688, 7
        %v690 = vsub.s32 0, %v689
        %v691 = vrot.slane %v686, %v690
        %v692 = vlaneseq
        %v693 = vshrl.u32 %v692, 7
        %v694 = vsub.s32 1, %v693
        %v695 = vrot.slane %v686, %v694
        %v698 = vmul.f32 %v659, %v691
        %v699 = vmul.f32 %v661, %v695
        %701 = vset.pattern.permute.xlu0 0
        %702 = vperm.xlu0 %701, %v698
        %v703 = vpop.permute.xlu0 %702
        %706 = vset.pattern.permute.xlu0 0
        %707 = vperm.xlu0 %706, %v699
        %v708 = vpop.permute.xlu0 %707
        %v710 = vmul.f32 %v703, %v465
        %v711 = vmul.f32 %v708, %v466
        %v712 = vsel %vm475, %v710, 0.0
        %v713 = vrot.slane %v712, 4
        %v714 = vadd.f32 %v712, %v713
        %v715 = vrot.slane %v714, 2
        %v716 = vadd.f32 %v714, %v715
        %v717 = vrot.slane %v716, 1
        %v718 = vadd.f32 %v716, %v717
        %v719 = vsel %vm475, %v711, 0.0
        %v720 = vrot.slane %v719, 4
        %v721 = vadd.f32 %v719, %v720
        %v722 = vrot.slane %v721, 2
        %v723 = vadd.f32 %v721, %v722
        %v724 = vrot.slane %v723, 1
        %v725 = vadd.f32 %v723, %v724
        %730 = vrot.lane.b32.xlu0 %v467, 32
        %v731 = vpop.permute.xlu0 %730
        %732 = vrot.lane.b32.xlu0 %v468, 32
        %v733 = vpop.permute.xlu0 %732
        %734 = vrot.lane.b32.xlu0 %v469, 32
        %v735 = vpop.permute.xlu0 %734
        %736 = vrot.lane.b32.xlu0 %v470, 32
        %v737 = vpop.permute.xlu0 %736
        %v742 = vadd.f32 %v577, %v731
        %v743 = vadd.f32 %v577, %v733
        %v744 = vadd.f32 %v581, %v735
        %v745 = vadd.f32 %v581, %v737
        %v746 = vtanh.pop %v742
        %v747 = vtanh.pop %v743
        %v748 = vtanh.pop %v744
        %v749 = vtanh.pop %v745
        %v750 = vlaneseq
        %v751 = vshrl.u32 %v750, 7
        %v752 = vsub.s32 0, %v751
        %v753 = vrot.slane %v550, %v752
        %755 = vrot.lane.b32.xlu0 %v753, 32
        %v756 = vpop.permute.xlu0 %755
        %v758 = vmul.f32 %v746, %v756
        %v759 = vmul.f32 %v747, %v756
        %v760 = vmul.f32 %v748, %v756
        %v761 = vmul.f32 %v749, %v756
        %766 = vrot.lane.b32.xlu0 %v758, 96
        %v767 = vpop.permute.xlu0 %766
        %768 = vrot.lane.b32.xlu0 %v759, 96
        %v769 = vpop.permute.xlu0 %768
        %770 = vrot.lane.b32.xlu0 %v760, 96
        %v771 = vpop.permute.xlu0 %770
        %772 = vrot.lane.b32.xlu0 %v761, 96
        %v773 = vpop.permute.xlu0 %772
        %v778 = vsel %vm475, %v767, 0.0
        %779 = vadd.xlane.f32.xlu0 %v778
        %v780 = vpop.xlane.xlu0 %779
        %v781 = vsel %vm475, %v769, 0.0
        %782 = vadd.xlane.f32.xlu0 %v781
        %v783 = vpop.xlane.xlu0 %782
        %v784 = vsel %vm475, %v771, 0.0
        %785 = vadd.xlane.f32.xlu0 %v784
        %v786 = vpop.xlane.xlu0 %785
        %v787 = vsel %vm475, %v773, 0.0
        %788 = vadd.xlane.f32.xlu0 %v787
        %v789 = vpop.xlane.xlu0 %788
        %v794 = vlaneseq
        %v795 = vshrl.u32 %v794, 7
        %v796 = vsub.s32 %v629, %v795
        %v797 = vrot.slane %v780, %v796
        %v798 = vadd.s32 %v629, 4294967288
        %v799 = vlaneseq
        %v800 = vshrl.u32 %v799, 7
        %v801 = vsub.s32 %v798, %v800
        %v802 = vrot.slane %v783, %v801
        %vm803 = vcmask 130112
        %v804 = vsel %vm803, %v802, %v797
        %v805 = vlaneseq
        %v806 = vshrl.u32 %v805, 7
        %v807 = vsub.s32 %v629, %v806
        %v808 = vrot.slane %v786, %v807
        %v809 = vlaneseq
        %v810 = vshrl.u32 %v809, 7
        %v811 = vsub.s32 %v798, %v810
        %v812 = vrot.slane %v789, %v811
        %v813 = vsel %vm803, %v812, %v808
        %v814 = vsel %vm638, %v813, %v804
        %vm816 = vcmask 123904
        %v817 = vsel %vm816, %v814, -inf
        %818 = vmax.xlane.f32.xlu0 %v817
        %v819 = vpop.xlane.xlu0 %818
        %v821 = vlaneseq
        %v822 = vshrl.u32 %v821, 7
        %v823 = vsub.s32 0, %v822
        %v824 = vrot.slane %v819, %v823
        %v825 = vlaneseq
        %v826 = vshrl.u32 %v825, 7
        %v827 = vsub.s32 1, %v826
        %v828 = vrot.slane %v819, %v827
        %v831 = vsub.f32 %v780, %v824
        %v832 = vsub.f32 %v783, %v824
        %v833 = vsub.f32 %v786, %v828
        %v834 = vsub.f32 %v789, %v828
        %v835 = vmul.f32 %v831, 1.442695
        %v836 = vpow.pop %v835
        %v837 = vmul.f32 %v832, 1.442695
        %v838 = vpow.pop %v837
        %v839 = vmul.f32 %v833, 1.442695
        %v840 = vpow.pop %v839
        %v841 = vmul.f32 %v834, 1.442695
        %v842 = vpow.pop %v841
        %847 = vset.pattern.permute.xlu0 0
        %848 = vperm.xlu0 %847, %v836
        %v849 = vpop.permute.xlu0 %848
        %850 = vset.pattern.permute.xlu0 0
        %851 = vperm.xlu0 %850, %v838
        %v852 = vpop.permute.xlu0 %851
        %853 = vset.pattern.permute.xlu0 0
        %854 = vperm.xlu0 %853, %v840
        %v855 = vpop.permute.xlu0 %854
        %856 = vset.pattern.permute.xlu0 0
        %857 = vperm.xlu0 %856, %v842
        %v858 = vpop.permute.xlu0 %857
        %v859 = vlaneseq
        %v860 = vshrl.u32 %v859, 7
        %v861 = vsub.s32 %v629, %v860
        %v862 = vrot.slane %v849, %v861
        %v863 = vlaneseq
        %v864 = vshrl.u32 %v863, 7
        %v865 = vsub.s32 %v798, %v864
        %v866 = vrot.slane %v852, %v865
        %v867 = vsel %vm803, %v866, %v862
        %v868 = vlaneseq
        %v869 = vshrl.u32 %v868, 7
        %v870 = vsub.s32 %v629, %v869
        %v871 = vrot.slane %v855, %v870
        %v872 = vlaneseq
        %v873 = vshrl.u32 %v872, 7
        %v874 = vsub.s32 %v798, %v873
        %v875 = vrot.slane %v858, %v874
        %v876 = vsel %vm803, %v875, %v871
        %v877 = vsel %vm638, %v876, %v867
        %v879 = vsel %vm816, %v877, 0.0
        %880 = vadd.xlane.f32.xlu0 %v879
        %v881 = vpop.xlane.xlu0 %880
        %v882 = vrcp.pop %v881
        %v883 = vmul.f32 %v881, %v882
        %v884 = vsub.f32 2.0, %v883
        %v885 = vmul.f32 %v882, %v884
        %v887 = vlaneseq
        %v888 = vshrl.u32 %v887, 7
        %v889 = vsub.s32 0, %v888
        %v890 = vrot.slane %v885, %v889
        %v891 = vlaneseq
        %v892 = vshrl.u32 %v891, 7
        %v893 = vsub.s32 1, %v892
        %v894 = vrot.slane %v885, %v893
        %v897 = vmul.f32 %v836, %v890
        %v898 = vmul.f32 %v838, %v890
        %v899 = vmul.f32 %v840, %v894
        %v900 = vmul.f32 %v842, %v894
        %902 = vset.pattern.permute.xlu0 0
        %903 = vperm.xlu0 %902, %v897
        %v904 = vpop.permute.xlu0 %903
        %907 = vset.pattern.permute.xlu0 0
        %908 = vperm.xlu0 %907, %v898
        %v909 = vpop.permute.xlu0 %908
        %912 = vset.pattern.permute.xlu0 0
        %913 = vperm.xlu0 %912, %v899
        %v914 = vpop.permute.xlu0 %913
        %917 = vset.pattern.permute.xlu0 0
        %918 = vperm.xlu0 %917, %v900
        %v919 = vpop.permute.xlu0 %918
        %v921 = vmul.f32 %v904, %v467
        %v922 = vmul.f32 %v909, %v468
        %v923 = vmul.f32 %v914, %v469
        %v924 = vmul.f32 %v919, %v470
        %v925 = vsel %vm475, %v921, 0.0
        %v926 = vsel %vm475, %v922, 0.0
        %v927 = vadd.f32 %v925, %v926
        %v928 = vrot.slane %v927, 4
        %v929 = vadd.f32 %v927, %v928
        %v930 = vrot.slane %v929, 2
        %v931 = vadd.f32 %v929, %v930
        %v932 = vrot.slane %v931, 1
        %v933 = vadd.f32 %v931, %v932
        %v934 = vsel %vm475, %v923, 0.0
        %v935 = vsel %vm475, %v924, 0.0
        %v936 = vadd.f32 %v934, %v935
        %v937 = vrot.slane %v936, 4
        %v938 = vadd.f32 %v936, %v937
        %v939 = vrot.slane %v938, 2
        %v940 = vadd.f32 %v938, %v939
        %v941 = vrot.slane %v940, 1
        %v942 = vadd.f32 %v940, %v941
        %v943 = vld [vmem:[%s7] sm:$0xff]
        %v944 = vld [vmem:[%s7 + $0x8] sm:$0xff]
        %v945 = vld [vmem:[%s7 + $0x10] sm:$0xff]
        %v946 = vld [vmem:[%s7 + $0x18] sm:$0xff]
        %v947 = vld [vmem:[%s7 + $0x20] sm:$0xff]
        %v948 = vld [vmem:[%s7 + $0x28] sm:$0xff]
        %v949 = vld [vmem:[%s7 + $0x30] sm:$0xff]
        %v950 = vld [vmem:[%s7 + $0x38] sm:$0xff]
        %v951 = vld [vmem:[%s7 + $0x40] sm:$0xff]
        %v952 = vld [vmem:[%s7 + $0x48] sm:$0xff]
        %v953 = vld [vmem:[%s7 + $0x50] sm:$0xff]
        %v954 = vld [vmem:[%s7 + $0x58] sm:$0xff]
        %v955 = vld [vmem:[%s7 + $0x60] sm:$0xff]
        %v956 = vld [vmem:[%s7 + $0x68] sm:$0xff]
        %v957 = vld [vmem:[%s7 + $0x70] sm:$0xff]
        %v958 = vld [vmem:[%s7 + $0x78] sm:$0xff]
        %v961 = vsel %vm638, %v725, %v718
        %962 = vrot.lane.b32.xlu0 %v961, 32
        %v963 = vpop.permute.xlu0 %962
        %v967 = vsel %vm638, %v942, %v933
        %968 = vrot.lane.b32.xlu0 %v967, 64
        %v969 = vpop.permute.xlu0 %968
        %971 = vrot.lane.b32.xlu0 %v462, 96
        %v972 = vpop.permute.xlu0 %971
        %v974 = vsel %vm475, %v464, %v963
        %vm975 = vcmask 523264
        %v976 = vsel %vm975, %v974, %v969
        %vm977 = vcmask 785408
        %v978 = vsel %vm977, %v976, %v972
        %v979 = vld [vmem:[%s8] sm:$0x1]
        %v981 = vlaneseq
        %v982 = vshrl.u32 %v981, 7
        %v983 = vsub.s32 0, %v982
        %v984 = vrot.slane %v979, %v983
        %986 = vmatprep.subr.mxu0 0.0
        %987 = vmatpush1.msra.mxu0 %v958
        %988 = vmatprep.subr.mxu0 0.0
        %989 = vmatpush1.msra.mxu0 %v957
        %990 = vmatprep.subr.mxu0 0.0
        %991 = vmatpush1.msra.mxu0 %v956
        %992 = vmatprep.subr.mxu0 0.0
        %993 = vmatpush1.msra.mxu0 %v955
        %994 = vmatprep.subr.mxu0 0.0
        %995 = vmatpush1.msra.mxu0 %v954
        %996 = vmatprep.subr.mxu0 0.0
        %997 = vmatpush1.msra.mxu0 %v953
        %998 = vmatprep.subr.mxu0 0.0
        %999 = vmatpush1.msra.mxu0 %v952
        %1000 = vmatprep.subr.mxu0 0.0
        %1001 = vmatpush1.msra.mxu0 %v951
        %1002 = vmatprep.subr.mxu0 0.0
        %1003 = vmatpush1.msra.mxu0 %v950
        %1004 = vmatprep.subr.mxu0 0.0
        %1005 = vmatpush1.msra.mxu0 %v949
        %1006 = vmatprep.subr.mxu0 0.0
        %1007 = vmatpush1.msra.mxu0 %v948
        %1008 = vmatprep.subr.mxu0 0.0
        %1009 = vmatpush1.msra.mxu0 %v947
        %1010 = vmatprep.subr.mxu0 0.0
        %1011 = vmatpush1.msra.mxu0 %v946
        %1012 = vmatprep.subr.mxu0 0.0
        %1013 = vmatpush1.msra.mxu0 %v945
        %1014 = vmatprep.subr.mxu0 0.0
        %1015 = vmatpush1.msra.mxu0 %v944
        %1016 = vmatprep.subr.mxu0 0.0
        %1017 = vmatpush1.msra.mxu0 %v943
        %1018 = vmatprep.subr.mxu0 0.0
        %1019 = vmatpush2.msra.mxu0 0.0
        %1020 = vmatprep.subr.mxu0 0.0
        %1021 = vmatpush2.msra.mxu0 0.0
        %1022 = vmatprep.subr.mxu0 0.0
        %1023 = vmatpush2.msra.mxu0 0.0
        %1024 = vmatprep.subr.mxu0 0.0
        %1025 = vmatpush2.msra.mxu0 0.0
        %1026 = vmatprep.subr.mxu0 0.0
        %1027 = vmatpush2.msra.mxu0 0.0
        %1028 = vmatprep.subr.mxu0 0.0
        %1029 = vmatpush2.msra.mxu0 0.0
        %1030 = vmatprep.subr.mxu0 0.0
        %1031 = vmatpush2.msra.mxu0 0.0
        %1032 = vmatprep.subr.mxu0 0.0
        %1033 = vmatpush2.msra.mxu0 0.0
        %1034 = vmatprep.subr.mxu0 0.0
        %1035 = vmatpush2.msra.mxu0 0.0
        %1036 = vmatprep.subr.mxu0 0.0
        %1037 = vmatpush2.msra.mxu0 0.0
        %1038 = vmatprep.subr.mxu0 0.0
        %1039 = vmatpush2.msra.mxu0 0.0
        %1040 = vmatprep.subr.mxu0 0.0
        %1041 = vmatpush2.msra.mxu0 0.0
        %1042 = vmatprep.subr.mxu0 0.0
        %1043 = vmatpush2.msra.mxu0 0.0
        %1044 = vmatprep.subr.mxu0 0.0
        %1045 = vmatpush2.msra.mxu0 0.0
        %1046 = vmatprep.subr.mxu0 0.0
        %1047 = vmatpush2.msra.mxu0 0.0
        %1048 = vmatprep.subr.mxu0 0.0
        %1049 = vmatpush2.msra.mxu0 0.0
        %1050 = vmatprep.mubr.f32.mxu0 0.0
        %1051 = vmatmul.mubr.f32.gmra.mxu0 %v978
        %v1052 = vpop.f32.mrf.mxu0
        %v1053 = vadd.f32 %v984, %v1052
        %v1054 = vpop.f32.mrf.mxu0
        %1055 = vdwg.mxu0
        %v1056 = vxor.u32 %v1053, 2147483648
        %v1057 = vmul.f32 %v1056, 1.442695
        %v1058 = vpow.pop %v1057
        %v1059 = vadd.f32 %v1058, 1.0
        %v1060 = vrcp.pop %v1059
        %v1061 = vmul.f32 1.0, %v1060
        %v1062 = vtanh.pop %v1053
        %1064 = vrot.lane.b32.xlu0 %v463, 32
        %v1065 = vpop.permute.xlu0 %1064
        %v1067 = vmul.f32 %v1061, %v1065
        %1069 = vrot.lane.b32.xlu0 %v1062, 64
        %v1070 = vpop.permute.xlu0 %1069
        %v1072 = vmul.f32 %v1061, %v1070
        %1074 = vrot.lane.b32.xlu0 %v1072, 32
        %v1075 = vpop.permute.xlu0 %1074
        %v1077 = vadd.f32 %v1067, %v1075
        %v1078 = vtanh.pop %v1077
        %1080 = vrot.lane.b32.xlu0 %v1078, 64
        %v1081 = vpop.permute.xlu0 %1080
        %v1083 = vmul.f32 %v1061, %v1081
        %1085 = vrot.lane.b32.xlu0 %v1083, 32
        %v1086 = vpop.permute.xlu0 %1085
        %vm1088 = vcmask 254976
        %1089 = vst.msk [vmem:[#allocation2] sm:$0x3] %vm1088, %v1086
        %1091 = vrot.lane.b32.xlu0 %v1077, 96
        %v1092 = vpop.permute.xlu0 %1091
        %1094 = vst.msk [vmem:[#allocation3] sm:$0x3] %vm1088, %v1092
        %v1095 = vld [vmem:[%s9] sm:$0xff]
        %v1096 = vld [vmem:[%s9 + $0x8] sm:$0xff]
        %v1097 = vld [vmem:[%s9 + $0x10] sm:$0xff]
        %v1098 = vld [vmem:[%s9 + $0x18] sm:$0xff]
        %v1099 = vld [vmem:[%s9 + $0x20] sm:$0xff]
        %v1100 = vld [vmem:[%s9 + $0x28] sm:$0xff]
        %v1101 = vld [vmem:[%s9 + $0x30] sm:$0xff]
        %v1102 = vld [vmem:[%s9 + $0x38] sm:$0xff]
        %v1103 = vld [vmem:[%s9 + $0x40] sm:$0xff]
        %v1104 = vld [vmem:[%s9 + $0x48] sm:$0xff]
        %v1105 = vld [vmem:[%s9 + $0x50] sm:$0xff]
        %v1106 = vld [vmem:[%s9 + $0x58] sm:$0xff]
        %v1107 = vld [vmem:[%s9 + $0x60] sm:$0xff]
        %v1108 = vld [vmem:[%s9 + $0x68] sm:$0xff]
        %v1109 = vld [vmem:[%s9 + $0x70] sm:$0xff]
        %v1110 = vld [vmem:[%s9 + $0x78] sm:$0xff]
        %1111 = vrot.lane.b32.xlu0 %v1083, 64
        %v1112 = vpop.permute.xlu0 %1111
        %1114 = vrot.lane.b32.xlu0 %v961, 64
        %v1115 = vpop.permute.xlu0 %1114
        %1117 = vrot.lane.b32.xlu0 %v967, 96
        %v1118 = vpop.permute.xlu0 %1117
        %v1120 = vsel %vm475, %v464, %v1112
        %v1121 = vsel %vm975, %v1120, %v1115
        %v1122 = vsel %vm977, %v1121, %v1118
        %1123 = vmatprep.subr.mxu0 0.0
        %1124 = vmatpush1.msra.mxu0 %v1110
        %1125 = vmatprep.subr.mxu0 0.0
        %1126 = vmatpush1.msra.mxu0 %v1109
        %1127 = vmatprep.subr.mxu0 0.0
        %1128 = vmatpush1.msra.mxu0 %v1108
        %1129 = vmatprep.subr.mxu0 0.0
        %1130 = vmatpush1.msra.mxu0 %v1107
        %1131 = vmatprep.subr.mxu0 0.0
        %1132 = vmatpush1.msra.mxu0 %v1106
        %1133 = vmatprep.subr.mxu0 0.0
        %1134 = vmatpush1.msra.mxu0 %v1105
        %1135 = vmatprep.subr.mxu0 0.0
        %1136 = vmatpush1.msra.mxu0 %v1104
        %1137 = vmatprep.subr.mxu0 0.0
        %1138 = vmatpush1.msra.mxu0 %v1103
        %1139 = vmatprep.subr.mxu0 0.0
        %1140 = vmatpush1.msra.mxu0 %v1102
        %1141 = vmatprep.subr.mxu0 0.0
        %1142 = vmatpush1.msra.mxu0 %v1101
        %1143 = vmatprep.subr.mxu0 0.0
        %1144 = vmatpush1.msra.mxu0 %v1100
        %1145 = vmatprep.subr.mxu0 0.0
        %1146 = vmatpush1.msra.mxu0 %v1099
        %1147 = vmatprep.subr.mxu0 0.0
        %1148 = vmatpush1.msra.mxu0 %v1098
        %1149 = vmatprep.subr.mxu0 0.0
        %1150 = vmatpush1.msra.mxu0 %v1097
        %1151 = vmatprep.subr.mxu0 0.0
        %1152 = vmatpush1.msra.mxu0 %v1096
        %1153 = vmatprep.subr.mxu0 0.0
        %1154 = vmatpush1.msra.mxu0 %v1095
        %1155 = vmatprep.subr.mxu0 0.0
        %1156 = vmatpush2.msra.mxu0 0.0
        %1157 = vmatprep.subr.mxu0 0.0
        %1158 = vmatpush2.msra.mxu0 0.0
        %1159 = vmatprep.subr.mxu0 0.0
        %1160 = vmatpush2.msra.mxu0 0.0
        %1161 = vmatprep.subr.mxu0 0.0
        %1162 = vmatpush2.msra.mxu0 0.0
        %1163 = vmatprep.subr.mxu0 0.0
        %1164 = vmatpush2.msra.mxu0 0.0
        %1165 = vmatprep.subr.mxu0 0.0
        %1166 = vmatpush2.msra.mxu0 0.0
        %1167 = vmatprep.subr.mxu0 0.0
        %1168 = vmatpush2.msra.mxu0 0.0
        %1169 = vmatprep.subr.mxu0 0.0
        %1170 = vmatpush2.msra.mxu0 0.0
        %1171 = vmatprep.subr.mxu0 0.0
        %1172 = vmatpush2.msra.mxu0 0.0
        %1173 = vmatprep.subr.mxu0 0.0
        %1174 = vmatpush2.msra.mxu0 0.0
        %1175 = vmatprep.subr.mxu0 0.0
        %1176 = vmatpush2.msra.mxu0 0.0
        %1177 = vmatprep.subr.mxu0 0.0
        %1178 = vmatpush2.msra.mxu0 0.0
        %1179 = vmatprep.subr.mxu0 0.0
        %1180 = vmatpush2.msra.mxu0 0.0
        %1181 = vmatprep.subr.mxu0 0.0
        %1182 = vmatpush2.msra.mxu0 0.0
        %1183 = vmatprep.subr.mxu0 0.0
        %1184 = vmatpush2.msra.mxu0 0.0
        %1185 = vmatprep.subr.mxu0 0.0
        %1186 = vmatpush2.msra.mxu0 0.0
        %1187 = vmatprep.mubr.f32.mxu0 0.0
        %1188 = vmatmul.mubr.f32.gmra.mxu0 %v1122
        %v1189 = vpop.f32.mrf.mxu0
        %v1190 = vadd.f32 0.0, %v1189
        %v1191 = vpop.f32.mrf.mxu0
        %1192 = vdwg.mxu0
        %1193 = vst.msk [vmem:[%s443] sm:$0x3] %vm1088, %v1190
        %v1194 = vld [vmem:[#allocation14] sm:$0x3]
        %v1195 = vlaneseq
        %v1196 = vshrl.u32 %v1195, 7
        %v1197 = vsub.s32 %v629, %v1196
        %v1198 = vrot.slane %v904, %v1197
        %v1199 = vlaneseq
        %v1200 = vshrl.u32 %v1199, 7
        %v1201 = vsub.s32 %v798, %v1200
        %v1202 = vrot.slane %v909, %v1201
        %v1203 = vsel %vm803, %v1202, %v1198
        %v1204 = vlaneseq
        %v1205 = vshrl.u32 %v1204, 7
        %v1206 = vsub.s32 %v629, %v1205
        %v1207 = vrot.slane %v914, %v1206
        %v1208 = vlaneseq
        %v1209 = vshrl.u32 %v1208, 7
        %v1210 = vsub.s32 %v798, %v1209
        %v1211 = vrot.slane %v919, %v1210
        %v1212 = vsel %vm803, %v1211, %v1207
        %v1213 = vsel %vm638, %v1212, %v1203
        %v1215 = vadd.f32 %v1194, %v1213
        %1216 = vst.msk [vmem:[#allocation14] sm:$0x3] %vm816, %v1215
        %s1217 = sand.u32 %s253, 1
        %s1218 = scalar_lea.sflag [#allocation6], %s1217
        %s1219 = sand.u32 %s253, 1
        %s1220 = smul.addr %s1219, 2
        %s1221 = scalar_lea.vmem [#allocation13], %s1220
        // Predicated region
        $region85: #{tpu_custom_call.1} parent=59 // pred_check
          %p1222 = pneg %p263
        $region86: #{tpu_custom_call.1} parent=59 // pred_check_branch
          %1224 = sbr.rel (%p1222) target = $region88
        $region87: #{tpu_custom_call.1} parent=59 // pred_region
          %s1226 = ssub.s32 32, 32
          %1227 = vsyncadd %s1218, %s1226
          %s1228 = smul.addr %s30, 32
          %s1229 = scalar_lea.hbm %s10, %s1228
          %s1231 = sshll.u32 %s1221, 4
          %s1232 = int_to_ptr.vmem [resolvable:$true] %s1231
          %1234 = dma.vmem_to_hbm [thread:$0]  %s1232, 32, %s1229, %s1218
        $region88: #{tpu_custom_call.1} parent=59 // pred_fallthru
          _
        // Predicated region
        $region89: #{tpu_custom_call.1} parent=59 // pred_check
          %p1235 = pneg %p284
        $region90: #{tpu_custom_call.1} parent=59 // pred_check_branch
          %1237 = sbr.rel (%p1235) target = $region92
        $region91: #{tpu_custom_call.1} parent=59 // pred_region
          %s1239 = ssub.s32 32, 32
          %1240 = vsyncadd [#allocation15], %s1239
          %s1242 = sshll.u32 [#allocation14], 4
          %s1243 = int_to_ptr.vmem [resolvable:$true] %s1242
          %1245 = dma.vmem_to_hbm [thread:$0]  %s1243, 32, %s11, [#allocation15]
        $region92: #{tpu_custom_call.1} parent=59 // pred_fallthru
          _
        // Predicated region
        $region93: #{tpu_custom_call.1} parent=59 // pred_check
          %p1246 = pneg %p284
        $region94: #{tpu_custom_call.1} parent=59 // pred_check_branch
          %1248 = sbr.rel (%p1246) target = $region96
        $region95: #{tpu_custom_call.1} parent=59 // pred_region
          %1249 = dma.done [#allocation15], 32
        $region96: #{tpu_custom_call.1} parent=59 // pred_fallthru
          _
      $region60: #{tpu_custom_call.1} parent=5 // pred_fallthru
        _
      %p1250 = scmp.le.s32.totalorder 2, %s25
      // Predicated region
      $region97: #{tpu_custom_call.1} parent=5 // pred_check
        %p1251 = pneg %p1250
      $region98: #{tpu_custom_call.1} parent=5 // pred_check_branch
        %1253 = sbr.rel (%p1251) target = $region100
      $region99: #{tpu_custom_call.1} parent=5 // pred_region
        %s1254 = ssub.s32 %s25, 2
        // Predicated region
        $region101: #{tpu_custom_call.1} parent=99 // pred_check
          %p1255 = pneg %p269
        $region102: #{tpu_custom_call.1} parent=99 // pred_check_branch
          %1257 = sbr.rel (%p1255) target = $region104
        $region103: #{tpu_custom_call.1} parent=99 // pred_region
          %s1258 = sand.u32 %s254, 1
          %s1259 = scalar_lea.sflag [#allocation6], %s1258
          %s1260 = sand.u32 %s254, 1
          %s1261 = smul.addr %s1260, 2
          %s1262 = scalar_lea.vmem [#allocation13], %s1261
          %1263 = dma.done %s1259, 32
        $region104: #{tpu_custom_call.1} parent=99 // pred_fallthru
          _
      $region100: #{tpu_custom_call.1} parent=5 // pred_fallthru
        _
    $region6: #{tpu_custom_call.1} parent=1 // loop_footer
      %s29 = sadd.s32 1, %s25
    $region7: #{tpu_custom_call.1} parent=1 // loop_footer_branch
      %24 = sbr.rel target = $region3
    $region8: #{tpu_custom_call.1} parent=1 // loop_exit
      _
    %1264 = vsyncpa [#allocation5], 1
    %s1265 = scalar_lea.sflag [#allocation5], 1
    %1266 = vsyncpa %s1265, 1
    %1267 = vsyncpa [#allocation8], 1
    %1268 = vsyncpa [#allocation11], 1
    %1269 = vsyncpa [#allocation6], 1
    %s1270 = scalar_lea.sflag [#allocation6], 1
    %1271 = vsyncpa %s1270, 1
    %1272 = vsyncpa [#allocation15], 1

</llo_original>
